<compile_context>
chip_gen: v7x
topology: tpu7x:2x2x1
jax: 0.10.0
libtpu: 0.0.40
codegen_flags: <defaults>
</compile_context>

<pallas_src>
import math

import jax
import jax.numpy as jnp
from jax.experimental import pallas as pl
from jax.experimental.pallas import tpu as pltpu


def _round_up(v: int, m: int) -> int:
    return ((v + m - 1) // m) * m


def _pick_tile(padded: int, max_tile: int, unit: int) -> int:
    """Largest multiple of `unit` that divides `padded` and is <= max_tile."""
    best = unit
    n = padded // unit
    for d in range(1, n + 1):
        if n % d == 0 and d * unit <= max_tile:
            best = d * unit
    return best


def _make_noisy_linear_kernel(use_scratch: bool):
    def kernel(x_ref, wmu_ref, wsig_ref, ei_ref, eo_ref, b_ref, o_ref, *scratch):
        acc_ref = scratch[0] if use_scratch else o_ref
        k = pl.program_id(2)

        @pl.when(k == 0)
        def _():
            acc_ref[...] = jnp.zeros_like(acc_ref)

        x = x_ref[...]
        # mu path: plain (t_b, t_k) @ (t_k, t_out) contraction (weights are
        # stored pre-transposed, so no NT contraction / layout fixup).
        part = jnp.dot(x, wmu_ref[...], preferred_element_type=jnp.float32)
        # sigma path: rank-1 factorized noise applied to the activations
        # (eps_in, lane-dense (1, t_k)) and to the output columns (eps_out,
        # lane-dense (1, t_out)).  The (Out, In) epsilon matrix is never
        # materialized, in HBM or in VMEM.
        part += eo_ref[...] * jnp.dot(x * ei_ref[...], wsig_ref[...],
                                      preferred_element_type=jnp.float32)
        acc_ref[...] += part

        @pl.when(k == pl.num_programs(2) - 1)
        def _():
            if use_scratch:
                o_ref[...] = (acc_ref[...] + b_ref[...]).astype(o_ref.dtype)
            else:
                o_ref[...] += b_ref[...]

    return kernel


def prepare_noisy_linear_params(weight_mu, weight_sigma, bias_mu, bias_sigma):
    """One-time layout work (analogue of module init): pad Out/In to lane
    multiples of 128 and transpose the weights to (In, Out).  Doing this once
    keeps the per-call path free of full-weight-sized HBM copies."""
    out_f, in_f = weight_mu.shape
    in_p = _round_up(in_f, 128)
    out_p = _round_up(out_f, 128)
    f32 = jnp.float32

    def pad_t(w):
        w = w.astype(f32)
        if (in_p, out_p) == (in_f, out_f):
            return w.T                       # already lane-aligned: transpose only
        return jnp.zeros((in_p, out_p), f32).at[:in_f, :out_f].set(w.T)

    return dict(
        weight_mu_t=pad_t(weight_mu),
        weight_sigma_t=pad_t(weight_sigma),
        bias_mu=bias_mu.astype(f32),
        bias_sigma=bias_sigma.astype(f32),
        in_features=in_f,
        out_features=out_f,
    )


def noisy_linear(x, prepared, eps_in, eps_out, *,
                 max_tile_b: int = 256, max_tile_out: int = 1024,
                 max_tile_k: int = 1024):
    """NoisyLinear forward: x @ (Wmu + Wsig*outer(eps_out, eps_in)).T + bias."""
    in_f = prepared["in_features"]
    out_f = prepared["out_features"]
    wmu_t = prepared["weight_mu_t"]
    wsig_t = prepared["weight_sigma_t"]
    in_p, out_p = wmu_t.shape

    batch = x.shape[0]
    out_dtype = x.dtype
    f32 = jnp.float32
    use_scratch = (out_dtype != jnp.float32)   # f32 outputs accumulate in-place

    # Tiles: batch in sublane (8) units; In/Out in lane (128) units, chosen as
    # divisors of the padded sizes so padding never grows past 128-alignment.
    t_b = min(_round_up(batch, 8), _round_up(max_tile_b, 8))
    batch_p = _round_up(batch, t_b)
    t_out = _pick_tile(out_p, max_tile_out, 128)
    t_k = _pick_tile(in_p, max_tile_k, 128)
    # Megacore (v7x has 2 TCs): keep >= 2 parallel work units when possible.
    if (batch_p // t_b) * (out_p // t_out) < 2 and out_p >= 256:
        t_out = _pick_tile(out_p, max(t_out // 2, 128), 128)

    # Per-call data: pad x only when needed; noise/bias rows are O(In)+O(Out).
    if (batch_p, in_p) != x.shape:
        xp = jnp.zeros((batch_p, in_p), x.dtype).at[:batch, :in_f].set(x)
    else:
        xp = x
    ei_row = jnp.zeros((1, in_p), f32).at[0, :in_f].set(eps_in.astype(f32))
    eo_row = jnp.zeros((1, out_p), f32).at[0, :out_f].set(eps_out.astype(f32))
    bias = prepared["bias_mu"] + prepared["bias_sigma"] * eps_out.astype(f32)
    b_row = jnp.zeros((1, out_p), f32).at[0, :out_f].set(bias)

    grid = (batch_p // t_b, out_p // t_out, in_p // t_k)
    scratch_shapes = [pltpu.VMEM((t_b, t_out), jnp.float32)] if use_scratch else []

    # Explicit VMEM budget: double-buffered blocks + accumulator + headroom
    # (covers v5e's 16 MiB default scoped limit at the 1024-wide weight tiles).
    vmem_est = (2 * t_b * t_k * x.dtype.itemsize
                + 2 * 2 * t_k * t_out * wmu_t.dtype.itemsize
                + 2 * t_b * t_out * out_dtype.itemsize
                + (t_b * t_out * 4 if use_scratch else 0)
                + 2 * 3 * 8 * max(t_k, t_out) * 4)
    vmem_limit = int(min(vmem_est + (4 << 20), 64 << 20))

    out_padded = pl.pallas_call(
        _make_noisy_linear_kernel(use_scratch),
        out_shape=jax.ShapeDtypeStruct((batch_p, out_p), out_dtype),
        grid_spec=pltpu.PrefetchScalarGridSpec(
            num_scalar_prefetch=0,
            grid=grid,
            in_specs=[
                pl.BlockSpec((t_b, t_k), lambda b, o, k: (b, k)),      # x
                pl.BlockSpec((t_k, t_out), lambda b, o, k: (k, o)),    # W_mu^T
                pl.BlockSpec((t_k, t_out), lambda b, o, k: (k, o)),    # W_sigma^T
                pl.BlockSpec((1, t_k), lambda b, o, k: (0, k)),        # eps_in row
                pl.BlockSpec((1, t_out), lambda b, o, k: (0, o)),      # eps_out row
                pl.BlockSpec((1, t_out), lambda b, o, k: (0, o)),      # folded bias
            ],
            out_specs=pl.BlockSpec((t_b, t_out), lambda b, o, k: (b, o)),
            scratch_shapes=scratch_shapes,
        ),
        compiler_params=pltpu.CompilerParams(
            dimension_semantics=("parallel", "parallel", "arbitrary"),
            vmem_limit_bytes=vmem_limit),
    )(xp, wmu_t, wsig_t, ei_row, eo_row, b_row)

    return out_padded[:batch, :out_f]


def scale_noise(key, size):
    """Factorized gaussian noise: f(x) = sign(x) * sqrt(|x|)."""
    x = jax.random.normal(key, (size,), dtype=jnp.float32)
    return jnp.sign(x) * jnp.sqrt(jnp.abs(x))


def init_noisy_linear_params(key, in_features, out_features, std_init=0.5):
    """Deterministic re-implementation of NoisyLinear.__init__/reset_*."""
    k_wmu, k_bmu, k_ein, k_eout = jax.random.split(key, 4)
    mu_range = 1.0 / math.sqrt(in_features)

    weight_mu = jax.random.uniform(
        k_wmu, (out_features, in_features), dtype=jnp.float32,
        minval=-mu_range, maxval=mu_range)
    weight_sigma = jnp.full((out_features, in_features),
                            std_init / math.sqrt(in_features), jnp.float32)
    bias_mu = jax.random.uniform(
        k_bmu, (out_features,), dtype=jnp.float32,
        minval=-mu_range, maxval=mu_range)
    bias_sigma = jnp.full((out_features,),
                          std_init / math.sqrt(out_features), jnp.float32)

    eps_in = scale_noise(k_ein, in_features)     # (In,)
    eps_out = scale_noise(k_eout, out_features)  # (Out,)

    return dict(weight_mu=weight_mu, weight_sigma=weight_sigma,
                bias_mu=bias_mu, bias_sigma=bias_sigma,
                eps_in=eps_in, eps_out=eps_out)


def reference_forward(x, p):
    # Exactly the PyTorch module's forward, with weight_epsilon =
    # outer(eps_out, eps_in) and bias_epsilon = eps_out, as set by reset_noise().
    weight_epsilon = jnp.outer(p["eps_out"], p["eps_in"])
    bias_epsilon = p["eps_out"]
    w = p["weight_mu"] + p["weight_sigma"] * weight_epsilon
    b = p["bias_mu"] + p["bias_sigma"] * bias_epsilon
    return x @ w.T + b


if __name__ == "__main__":
    # Full-precision f32 matmuls for BOTH the kernel and the reference, so the
    # tolerance check compares like with like (kernel structure is unchanged).
    jax.config.update("jax_default_matmul_precision", "highest")

    key = jax.random.PRNGKey(0)
    k_param, k_x = jax.random.split(key)

    batch, in_features, out_features = 8, 32, 64
    params = init_noisy_linear_params(k_param, in_features, out_features,
                                      std_init=0.5)
    x = jax.random.normal(k_x, (batch, in_features), dtype=jnp.float32)

    prepared = prepare_noisy_linear_params(
        params["weight_mu"], params["weight_sigma"],
        params["bias_mu"], params["bias_sigma"])

    out = noisy_linear(x, prepared, params["eps_in"], params["eps_out"])
    out = jax.block_until_ready(out)

    ref = reference_forward(x, params)
    assert out.shape == (batch, out_features)
    assert jnp.allclose(out, ref, atol=2e-5, rtol=1e-5), "mismatch vs reference"

    print("KERNEL_OK")
</pallas_src>

<mosaic_0001>
module attributes {stable_mosaic.version = 11 : i64} {
  func.func @kernel(%arg0: i32, %arg1: i32, %arg2: i32, %arg3: memref<8x128xf32, #tpu.memory_space<vmem>>, %arg4: memref<128x128xf32, #tpu.memory_space<vmem>>, %arg5: memref<128x128xf32, #tpu.memory_space<vmem>>, %arg6: memref<1x128xf32, #tpu.memory_space<vmem>>, %arg7: memref<1x128xf32, #tpu.memory_space<vmem>>, %arg8: memref<1x128xf32, #tpu.memory_space<vmem>>, %arg9: memref<8x128xf32, #tpu.memory_space<vmem>>) attributes {dimension_semantics = [#tpu.dimension_semantics<parallel>, #tpu.dimension_semantics<parallel>, #tpu.dimension_semantics<arbitrary>], iteration_bounds = array<i64: 1, 1, 1>, scalar_prefetch = 0 : i64, scratch_operands = 0 : i64, tpu.core_type = #tpu.core_type<tc>, window_params = [{transform_indices = @transform_0, window_bounds = array<i64: 8, 128>}, {transform_indices = @transform_1, window_bounds = array<i64: 128, 128>}, {transform_indices = @transform_2, window_bounds = array<i64: 128, 128>}, {transform_indices = @transform_3, window_bounds = array<i64: 1, 128>}, {transform_indices = @transform_4, window_bounds = array<i64: 1, 128>}, {transform_indices = @transform_5, window_bounds = array<i64: 1, 128>}, {transform_indices = @transform_6, window_bounds = array<i64: 8, 128>}]} {
    %c0_i32 = arith.constant 0 : i32
    %0 = arith.cmpi eq, %arg2, %c0_i32 : i32
    %1 = arith.extui %0 : i1 to i32
    %c0_i32_0 = arith.constant 0 : i32
    %2 = arith.cmpi ne, %1, %c0_i32_0 : i32
    scf.if %2 {
      %cst_17 = arith.constant 0.000000e+00 : f32
      %21 = vector.broadcast %cst_17 : f32 to vector<8x128xf32>
      %c0_18 = arith.constant 0 : index
      %c0_19 = arith.constant 0 : index
      %22 = vector.load %arg9[%c0_18, %c0_19] : memref<8x128xf32, #tpu.memory_space<vmem>>, vector<8x128xf32>
      tpu.vector_store %arg9[%c0_18, %c0_19], %21 {strides = array<i32>} : memref<8x128xf32, #tpu.memory_space<vmem>>, vector<8x128xf32>,
    } else {
    }
    %c0 = arith.constant 0 : index
    %c0_1 = arith.constant 0 : index
    %3 = vector.load %arg3[%c0, %c0_1] : memref<8x128xf32, #tpu.memory_space<vmem>>, vector<8x128xf32>
    %c0_2 = arith.constant 0 : index
    %c0_3 = arith.constant 0 : index
    %4 = vector.load %arg4[%c0_2, %c0_3] : memref<128x128xf32, #tpu.memory_space<vmem>>, vector<128x128xf32>
    %cst = arith.constant dense<0.000000e+00> : vector<8x128xf32>
    %5 = tpu.matmul %3, %4, %cst {dimension_numbers = #tpu.dot_dimension_numbers<[1], [0], [0], [1], [0, 0, 1, 1], [], []>, precision = #tpu.contract_precision<fp32>} : vector<8x128xf32>, vector<128x128xf32>, vector<8x128xf32> -> vector<8x128xf32>
    %c0_4 = arith.constant 0 : index
    %c0_5 = arith.constant 0 : index
    %6 = vector.load %arg7[%c0_4, %c0_5] : memref<1x128xf32, #tpu.memory_space<vmem>>, vector<1x128xf32>
    %c0_6 = arith.constant 0 : index
    %c0_7 = arith.constant 0 : index
    %7 = vector.load %arg6[%c0_6, %c0_7] : memref<1x128xf32, #tpu.memory_space<vmem>>, vector<1x128xf32>
    %8 = vector.broadcast %7 : vector<1x128xf32> to vector<8x128xf32>
    %9 = arith.mulf %3, %8 : vector<8x128xf32>
    %c0_8 = arith.constant 0 : index
    %c0_9 = arith.constant 0 : index
    %10 = vector.load %arg5[%c0_8, %c0_9] : memref<128x128xf32, #tpu.memory_space<vmem>>, vector<128x128xf32>
    %cst_10 = arith.constant dense<0.000000e+00> : vector<8x128xf32>
    %11 = tpu.matmul %9, %10, %cst_10 {dimension_numbers = #tpu.dot_dimension_numbers<[1], [0], [0], [1], [0, 0, 1, 1], [], []>, precision = #tpu.contract_precision<fp32>} : vector<8x128xf32>, vector<128x128xf32>, vector<8x128xf32> -> vector<8x128xf32>
    %12 = vector.broadcast %6 : vector<1x128xf32> to vector<8x128xf32>
    %13 = arith.mulf %12, %11 : vector<8x128xf32>
    %14 = arith.addf %5, %13 : vector<8x128xf32>
    %c0_11 = arith.constant 0 : index
    %c0_12 = arith.constant 0 : index
    %15 = vector.load %arg9[%c0_11, %c0_12] : memref<8x128xf32, #tpu.memory_space<vmem>>, vector<8x128xf32>
    %16 = arith.addf %15, %14 : vector<8x128xf32>
    %c0_13 = arith.constant 0 : index
    %c0_14 = arith.constant 0 : index
    %17 = vector.load %arg9[%c0_13, %c0_14] : memref<8x128xf32, #tpu.memory_space<vmem>>, vector<8x128xf32>
    tpu.vector_store %arg9[%c0_13, %c0_14], %16 {strides = array<i32>} : memref<8x128xf32, #tpu.memory_space<vmem>>, vector<8x128xf32>,
    %c0_i32_15 = arith.constant 0 : i32
    %18 = arith.cmpi eq, %arg2, %c0_i32_15 : i32
    %19 = arith.extui %18 : i1 to i32
    %c0_i32_16 = arith.constant 0 : i32
    %20 = arith.cmpi ne, %19, %c0_i32_16 : i32
    scf.if %20 {
      %c0_17 = arith.constant 0 : index
      %c0_18 = arith.constant 0 : index
      %21 = vector.load %arg9[%c0_17, %c0_18] : memref<8x128xf32, #tpu.memory_space<vmem>>, vector<8x128xf32>
      %c0_19 = arith.constant 0 : index
      %c0_20 = arith.constant 0 : index
      %22 = vector.load %arg8[%c0_19, %c0_20] : memref<1x128xf32, #tpu.memory_space<vmem>>, vector<1x128xf32>
      %23 = vector.broadcast %22 : vector<1x128xf32> to vector<8x128xf32>
      %24 = arith.addf %21, %23 : vector<8x128xf32>
      %c0_21 = arith.constant 0 : index
      %c0_22 = arith.constant 0 : index
      %25 = vector.load %arg9[%c0_21, %c0_22] : memref<8x128xf32, #tpu.memory_space<vmem>>, vector<8x128xf32>
      tpu.vector_store %arg9[%c0_21, %c0_22], %24 {strides = array<i32>} : memref<8x128xf32, #tpu.memory_space<vmem>>, vector<8x128xf32>,
    } else {
    }
    return
  }
  func.func @transform_0(%arg0: i32, %arg1: i32, %arg2: i32) -> (i32, i32) {
    %c0_i32 = arith.constant 0 : i32
    return %arg0, %arg2 : i32, i32
  }
  func.func @transform_1(%arg0: i32, %arg1: i32, %arg2: i32) -> (i32, i32) {
    %c0_i32 = arith.constant 0 : i32
    return %arg2, %arg1 : i32, i32
  }
  func.func @transform_2(%arg0: i32, %arg1: i32, %arg2: i32) -> (i32, i32) {
    %c0_i32 = arith.constant 0 : i32
    return %arg2, %arg1 : i32, i32
  }
  func.func @transform_3(%arg0: i32, %arg1: i32, %arg2: i32) -> (i32, i32) {
    %c0_i32 = arith.constant 0 : i32
    %c0_i32_0 = arith.constant 0 : i32
    return %c0_i32, %arg2 : i32, i32
  }
  func.func @transform_4(%arg0: i32, %arg1: i32, %arg2: i32) -> (i32, i32) {
    %c0_i32 = arith.constant 0 : i32
    %c0_i32_0 = arith.constant 0 : i32
    return %c0_i32, %arg1 : i32, i32
  }
  func.func @transform_5(%arg0: i32, %arg1: i32, %arg2: i32) -> (i32, i32) {
    %c0_i32 = arith.constant 0 : i32
    %c0_i32_0 = arith.constant 0 : i32
    return %c0_i32, %arg1 : i32, i32
  }
  func.func @transform_6(%arg0: i32, %arg1: i32, %arg2: i32) -> (i32, i32) {
    %c0_i32 = arith.constant 0 : i32
    return %arg0, %arg1 : i32, i32
  }
}

</mosaic_0001>

<llo_original>
// kernel: tpu_custom_call.1
$region0: #{tpu_custom_call.1}
  #allocation0 [shape = 'u32[]', space=smem, size = 0x4, offset = 0x4, fixed_abs, tag = 'smem constant byte address 0x4 - core index']
  #allocation1 [shape = 'u32[144,128]{1,0:T(1,128)}', space=vmem, size = 0x12000, scoped, tag = 'internal scratch']
  %s0 = inlined_call_operand.hbm [shape: f32[8,128], index: 0, kind: input, shape index: {}]
  %s1 = inlined_call_operand.hbm [shape: f32[128,128], index: 1, kind: input, shape index: {}]
  %s2 = inlined_call_operand.hbm [shape: f32[128,128], index: 2, kind: input, shape index: {}]
  %s3 = inlined_call_operand.vmem [shape: f32[1,128], index: 3, kind: input, shape index: {}]
  %s4 = inlined_call_operand.vmem [shape: f32[1,128], index: 4, kind: input, shape index: {}]
  %s5 = inlined_call_operand.vmem [shape: f32[1,128], index: 5, kind: input, shape index: {}]
  %s6 = inlined_call_operand.hbm [shape: f32[8,128], index: 6, kind: output, shape index: {}]
  %s7 = sld [smem:[#allocation0]]
  $region54: #{tpu_custom_call.1} parent=0
    _
  %s9 = ssub.s32 1, %s7
  %s10 = scalar_select 0, %s9, %s7
  $region1: #{tpu_custom_call.1} parent=0
    #allocation2 [shape = 'u8[4096]{0}', space=vmem, size = 0x1000, scoped, tag = 'input window, operand 0, single buffered']
    #allocation3 [shape = 's32[1]{0}', space=sflag, size = 0x4, scoped, tag = 'scoped memory for tpu_custom_call.1']
    #allocation4 [shape = 's32[1]{0}', space=sflag, size = 0x4, scoped, tag = 'scoped memory for tpu_custom_call.1']
    #allocation5 [shape = 'u8[65536]{0}', space=vmem, size = 0x10000, scoped, tag = 'input window, operand 1, single buffered']
    #allocation6 [shape = 's32[1]{0}', space=sflag, size = 0x4, scoped, tag = 'scoped memory for tpu_custom_call.1']
    #allocation7 [shape = 'u8[65536]{0}', space=vmem, size = 0x10000, scoped, tag = 'input window, operand 2, single buffered']
    #allocation8 [shape = 'u8[4096]{0}', space=vmem, size = 0x1000, scoped, tag = 'output window, operand 0, single buffered']
    %11 = vsyncpa [#allocation3], 0
    %12 = vsyncpa [#allocation6], 0
    %13 = vsyncpa [#allocation4], 0
    // Predicated region
    $region2: #{tpu_custom_call.1} parent=1 // pred_check
      _
    $region3: #{tpu_custom_call.1} parent=1 // pred_check_branch
      %15 = sbr.rel (0) target = $region5
    $region4: #{tpu_custom_call.1} parent=1 // pred_region
      %s17 = ssub.s32 128, 128
      %18 = vsyncadd [#allocation3], %s17
      %s20 = sshll.u32 [#allocation2], 4
      %s21 = int_to_ptr.vmem [resolvable:$true] %s20
      %23 = dma.hbm_to_vmem [thread:$0]  %s0, 128, %s21, [#allocation3]
    $region5: #{tpu_custom_call.1} parent=1 // pred_fallthru
      _
    // Predicated region
    $region6: #{tpu_custom_call.1} parent=1 // pred_check
      _
    $region7: #{tpu_custom_call.1} parent=1 // pred_check_branch
      %25 = sbr.rel (0) target = $region9
    $region8: #{tpu_custom_call.1} parent=1 // pred_region
      %s27 = ssub.s32 2048, 2048
      %28 = vsyncadd [#allocation6], %s27
      %s29 = sshll.u32 [#allocation5], 4
      %s30 = int_to_ptr.vmem [resolvable:$true] %s29
      %35 = dma.hbm_to_vmem [thread:$0]  %s1, 2048, %s30, [#allocation6], 128, 128, 8
    $region9: #{tpu_custom_call.1} parent=1 // pred_fallthru
      _
    // Predicated region
    $region10: #{tpu_custom_call.1} parent=1 // pred_check
      _
    $region11: #{tpu_custom_call.1} parent=1 // pred_check_branch
      %37 = sbr.rel (0) target = $region13
    $region12: #{tpu_custom_call.1} parent=1 // pred_region
      %s39 = ssub.s32 2048, 2048
      %40 = vsyncadd [#allocation6], %s39
      %s41 = sshll.u32 [#allocation7], 4
      %s42 = int_to_ptr.vmem [resolvable:$true] %s41
      %47 = dma.hbm_to_vmem [thread:$0]  %s2, 2048, %s42, [#allocation6], 128, 128, 8
    $region13: #{tpu_custom_call.1} parent=1 // pred_fallthru
      _
    // Predicated region
    $region14: #{tpu_custom_call.1} parent=1 // pred_check
      _
    $region15: #{tpu_custom_call.1} parent=1 // pred_check_branch
      %49 = sbr.rel (0) target = $region17
    $region16: #{tpu_custom_call.1} parent=1 // pred_region
      _
    $region17: #{tpu_custom_call.1} parent=1 // pred_fallthru
      _
    // Predicated region
    $region18: #{tpu_custom_call.1} parent=1 // pred_check
      _
    $region19: #{tpu_custom_call.1} parent=1 // pred_check_branch
      %51 = sbr.rel (0) target = $region21
    $region20: #{tpu_custom_call.1} parent=1 // pred_region
      _
    $region21: #{tpu_custom_call.1} parent=1 // pred_fallthru
      _
    // Predicated region
    $region22: #{tpu_custom_call.1} parent=1 // pred_check
      _
    $region23: #{tpu_custom_call.1} parent=1 // pred_check_branch
      %53 = sbr.rel (0) target = $region25
    $region24: #{tpu_custom_call.1} parent=1 // pred_region
      _
    $region25: #{tpu_custom_call.1} parent=1 // pred_fallthru
      _
    // Predicated region
    $region26: #{tpu_custom_call.1} parent=1 // pred_check
      _
    $region27: #{tpu_custom_call.1} parent=1 // pred_check_branch
      %55 = sbr.rel (0) target = $region29
    $region28: #{tpu_custom_call.1} parent=1 // pred_region
      %56 = dma.done [#allocation3], 128
    $region29: #{tpu_custom_call.1} parent=1 // pred_fallthru
      _
    // Predicated region
    $region30: #{tpu_custom_call.1} parent=1 // pred_check
      _
    $region31: #{tpu_custom_call.1} parent=1 // pred_check_branch
      %58 = sbr.rel (0) target = $region33
    $region32: #{tpu_custom_call.1} parent=1 // pred_region
      %59 = dma.done [#allocation6], 2048
    $region33: #{tpu_custom_call.1} parent=1 // pred_fallthru
      _
    // Predicated region
    $region34: #{tpu_custom_call.1} parent=1 // pred_check
      _
    $region35: #{tpu_custom_call.1} parent=1 // pred_check_branch
      %61 = sbr.rel (0) target = $region37
    $region36: #{tpu_custom_call.1} parent=1 // pred_region
      %62 = dma.done [#allocation6], 2048
    $region37: #{tpu_custom_call.1} parent=1 // pred_fallthru
      _
    %p63 = scmp.eq.s32.totalorder 0, 0
    // Predicated region
    $region38: #{tpu_custom_call.1} parent=1 // pred_check
      %p64 = pneg %p63
    $region39: #{tpu_custom_call.1} parent=1 // pred_check_branch
      %66 = sbr.rel (%p64) target = $region41
    $region40: #{tpu_custom_call.1} parent=1 // pred_region
      %67 = vst [vmem:[#allocation8] sm:$0xff] 0.0
    $region41: #{tpu_custom_call.1} parent=1 // pred_fallthru
      _
    %v68 = vld [vmem:[#allocation2] sm:$0xff]
    %v69 = vld [vmem:[#allocation5] sm:$0xff]
    %v70 = vld [vmem:[#allocation5 + $0x8] sm:$0xff]
    %v71 = vld [vmem:[#allocation5 + $0x10] sm:$0xff]
    %v72 = vld [vmem:[#allocation5 + $0x18] sm:$0xff]
    %v73 = vld [vmem:[#allocation5 + $0x20] sm:$0xff]
    %v74 = vld [vmem:[#allocation5 + $0x28] sm:$0xff]
    %v75 = vld [vmem:[#allocation5 + $0x30] sm:$0xff]
    %v76 = vld [vmem:[#allocation5 + $0x38] sm:$0xff]
    %v77 = vld [vmem:[#allocation5 + $0x40] sm:$0xff]
    %v78 = vld [vmem:[#allocation5 + $0x48] sm:$0xff]
    %v79 = vld [vmem:[#allocation5 + $0x50] sm:$0xff]
    %v80 = vld [vmem:[#allocation5 + $0x58] sm:$0xff]
    %v81 = vld [vmem:[#allocation5 + $0x60] sm:$0xff]
    %v82 = vld [vmem:[#allocation5 + $0x68] sm:$0xff]
    %v83 = vld [vmem:[#allocation5 + $0x70] sm:$0xff]
    %v84 = vld [vmem:[#allocation5 + $0x78] sm:$0xff]
    %v85 = vld [vmem:[%s4] sm:$0x1]
    %v86 = vld [vmem:[%s3] sm:$0x1]
    %v88 = vlaneseq
    %v89 = vshrl.u32 %v88, 7
    %v90 = vsub.s32 0, %v89
    %v91 = vrot.slane %v86, %v90
    %v93 = vmul.f32 %v68, %v91
    %v94 = vld [vmem:[#allocation7] sm:$0xff]
    %v95 = vld [vmem:[#allocation7 + $0x8] sm:$0xff]
    %v96 = vld [vmem:[#allocation7 + $0x10] sm:$0xff]
    %v97 = vld [vmem:[#allocation7 + $0x18] sm:$0xff]
    %v98 = vld [vmem:[#allocation7 + $0x20] sm:$0xff]
    %v99 = vld [vmem:[#allocation7 + $0x28] sm:$0xff]
    %v100 = vld [vmem:[#allocation7 + $0x30] sm:$0xff]
    %v101 = vld [vmem:[#allocation7 + $0x38] sm:$0xff]
    %v102 = vld [vmem:[#allocation7 + $0x40] sm:$0xff]
    %v103 = vld [vmem:[#allocation7 + $0x48] sm:$0xff]
    %v104 = vld [vmem:[#allocation7 + $0x50] sm:$0xff]
    %v105 = vld [vmem:[#allocation7 + $0x58] sm:$0xff]
    %v106 = vld [vmem:[#allocation7 + $0x60] sm:$0xff]
    %v107 = vld [vmem:[#allocation7 + $0x68] sm:$0xff]
    %v108 = vld [vmem:[#allocation7 + $0x70] sm:$0xff]
    %v109 = vld [vmem:[#allocation7 + $0x78] sm:$0xff]
    %110 = vmatprep.subr.mxu0 0.0
    %v111 = vand.u32 %v94, 4294901760
    %112 = vmatpush1.msra.mxu0 %v111
    %113 = vmatprep.subr.mxu0 0.0
    %v114 = vand.u32 %v95, 4294901760
    %115 = vmatpush1.msra.mxu0 %v114
    %116 = vmatprep.subr.mxu0 0.0
    %v117 = vand.u32 %v96, 4294901760
    %118 = vmatpush1.msra.mxu0 %v117
    %119 = vmatprep.subr.mxu0 0.0
    %v120 = vand.u32 %v97, 4294901760
    %121 = vmatpush1.msra.mxu0 %v120
    %122 = vmatprep.subr.mxu0 0.0
    %v123 = vand.u32 %v98, 4294901760
    %124 = vmatpush1.msra.mxu0 %v123
    %125 = vmatprep.subr.mxu0 0.0
    %v126 = vand.u32 %v99, 4294901760
    %127 = vmatpush1.msra.mxu0 %v126
    %128 = vmatprep.subr.mxu0 0.0
    %v129 = vand.u32 %v100, 4294901760
    %130 = vmatpush1.msra.mxu0 %v129
    %131 = vmatprep.subr.mxu0 0.0
    %v132 = vand.u32 %v101, 4294901760
    %133 = vmatpush1.msra.mxu0 %v132
    %134 = vmatprep.subr.mxu0 0.0
    %v135 = vand.u32 %v102, 4294901760
    %136 = vmatpush1.msra.mxu0 %v135
    %137 = vmatprep.subr.mxu0 0.0
    %v138 = vand.u32 %v103, 4294901760
    %139 = vmatpush1.msra.mxu0 %v138
    %140 = vmatprep.subr.mxu0 0.0
    %v141 = vand.u32 %v104, 4294901760
    %142 = vmatpush1.msra.mxu0 %v141
    %143 = vmatprep.subr.mxu0 0.0
    %v144 = vand.u32 %v105, 4294901760
    %145 = vmatpush1.msra.mxu0 %v144
    %146 = vmatprep.subr.mxu0 0.0
    %v147 = vand.u32 %v106, 4294901760
    %148 = vmatpush1.msra.mxu0 %v147
    %149 = vmatprep.subr.mxu0 0.0
    %v150 = vand.u32 %v107, 4294901760
    %151 = vmatpush1.msra.mxu0 %v150
    %152 = vmatprep.subr.mxu0 0.0
    %v153 = vand.u32 %v108, 4294901760
    %154 = vmatpush1.msra.mxu0 %v153
    %155 = vmatprep.subr.mxu0 0.0
    %v156 = vand.u32 %v109, 4294901760
    %157 = vmatpush1.msra.mxu0 %v156
    %158 = vmatprep.subr.mxu0 0.0
    %159 = vmatpush1.msra.mxu0 0.0
    %160 = vmatprep.subr.mxu0 0.0
    %161 = vmatpush1.msra.mxu0 0.0
    %162 = vmatprep.subr.mxu0 0.0
    %163 = vmatpush1.msra.mxu0 0.0
    %164 = vmatprep.subr.mxu0 0.0
    %165 = vmatpush1.msra.mxu0 0.0
    %166 = vmatprep.subr.mxu0 0.0
    %167 = vmatpush1.msra.mxu0 0.0
    %168 = vmatprep.subr.mxu0 0.0
    %169 = vmatpush1.msra.mxu0 0.0
    %170 = vmatprep.subr.mxu0 0.0
    %171 = vmatpush1.msra.mxu0 0.0
    %172 = vmatprep.subr.mxu0 0.0
    %173 = vmatpush1.msra.mxu0 0.0
    %174 = vmatprep.subr.mxu0 0.0
    %175 = vmatpush1.msra.mxu0 0.0
    %176 = vmatprep.subr.mxu0 0.0
    %177 = vmatpush1.msra.mxu0 0.0
    %178 = vmatprep.subr.mxu0 0.0
    %179 = vmatpush1.msra.mxu0 0.0
    %180 = vmatprep.subr.mxu0 0.0
    %181 = vmatpush1.msra.mxu0 0.0
    %182 = vmatprep.subr.mxu0 0.0
    %183 = vmatpush1.msra.mxu0 0.0
    %184 = vmatprep.subr.mxu0 0.0
    %185 = vmatpush1.msra.mxu0 0.0
    %186 = vmatprep.subr.mxu0 0.0
    %187 = vmatpush1.msra.mxu0 0.0
    %188 = vmatprep.subr.mxu0 0.0
    %189 = vmatpush1.msra.mxu0 0.0
    %190 = vmatprep.mubr.f32.mxu0 0.0
    %v191 = vand.u32 %v93, 4294901760
    %v192 = vsub.f32 %v93, %v191
    %v193 = vand.u32 %v192, 4294901760
    %v194 = vsub.f32 %v192, %v193
    %v195 = vand.u32 %v194, 4294901760
    %196 = vmatmul.mubr.f32.gmra.mrb[0].mxu0 %v195
    %v197 = vpop.f32.mrb[0].mxu0
    %v198 = vadd.f32 0.0, %v197
    %v199 = vpop.f32.mrb[0].mxu0
    %200 = vdwg.mxu0
    %201 = vmatprep.subr.mxu0 0.0
    %v202 = vand.u32 %v94, 4294901760
    %v203 = vsub.f32 %v94, %v202
    %v204 = vand.u32 %v203, 4294901760
    %v205 = vsub.f32 %v203, %v204
    %v206 = vand.u32 %v205, 4294901760
    %207 = vmatpush1.msra.mxu0 %v206
    %208 = vmatprep.subr.mxu0 0.0
    %v209 = vand.u32 %v95, 4294901760
    %v210 = vsub.f32 %v95, %v209
    %v211 = vand.u32 %v210, 4294901760
    %v212 = vsub.f32 %v210, %v211
    %v213 = vand.u32 %v212, 4294901760
    %214 = vmatpush1.msra.mxu0 %v213
    %215 = vmatprep.subr.mxu0 0.0
    %v216 = vand.u32 %v96, 4294901760
    %v217 = vsub.f32 %v96, %v216
    %v218 = vand.u32 %v217, 4294901760
    %v219 = vsub.f32 %v217, %v218
    %v220 = vand.u32 %v219, 4294901760
    %221 = vmatpush1.msra.mxu0 %v220
    %222 = vmatprep.subr.mxu0 0.0
    %v223 = vand.u32 %v97, 4294901760
    %v224 = vsub.f32 %v97, %v223
    %v225 = vand.u32 %v224, 4294901760
    %v226 = vsub.f32 %v224, %v225
    %v227 = vand.u32 %v226, 4294901760
    %228 = vmatpush1.msra.mxu0 %v227
    %229 = vmatprep.subr.mxu0 0.0
    %v230 = vand.u32 %v98, 4294901760
    %v231 = vsub.f32 %v98, %v230
    %v232 = vand.u32 %v231, 4294901760
    %v233 = vsub.f32 %v231, %v232
    %v234 = vand.u32 %v233, 4294901760
    %235 = vmatpush1.msra.mxu0 %v234
    %236 = vmatprep.subr.mxu0 0.0
    %v237 = vand.u32 %v99, 4294901760
    %v238 = vsub.f32 %v99, %v237
    %v239 = vand.u32 %v238, 4294901760
    %v240 = vsub.f32 %v238, %v239
    %v241 = vand.u32 %v240, 4294901760
    %242 = vmatpush1.msra.mxu0 %v241
    %243 = vmatprep.subr.mxu0 0.0
    %v244 = vand.u32 %v100, 4294901760
    %v245 = vsub.f32 %v100, %v244
    %v246 = vand.u32 %v245, 4294901760
    %v247 = vsub.f32 %v245, %v246
    %v248 = vand.u32 %v247, 4294901760
    %249 = vmatpush1.msra.mxu0 %v248
    %250 = vmatprep.subr.mxu0 0.0
    %v251 = vand.u32 %v101, 4294901760
    %v252 = vsub.f32 %v101, %v251
    %v253 = vand.u32 %v252, 4294901760
    %v254 = vsub.f32 %v252, %v253
    %v255 = vand.u32 %v254, 4294901760
    %256 = vmatpush1.msra.mxu0 %v255
    %257 = vmatprep.subr.mxu0 0.0
    %v258 = vand.u32 %v102, 4294901760
    %v259 = vsub.f32 %v102, %v258
    %v260 = vand.u32 %v259, 4294901760
    %v261 = vsub.f32 %v259, %v260
    %v262 = vand.u32 %v261, 4294901760
    %263 = vmatpush1.msra.mxu0 %v262
    %264 = vmatprep.subr.mxu0 0.0
    %v265 = vand.u32 %v103, 4294901760
    %v266 = vsub.f32 %v103, %v265
    %v267 = vand.u32 %v266, 4294901760
    %v268 = vsub.f32 %v266, %v267
    %v269 = vand.u32 %v268, 4294901760
    %270 = vmatpush1.msra.mxu0 %v269
    %271 = vmatprep.subr.mxu0 0.0
    %v272 = vand.u32 %v104, 4294901760
    %v273 = vsub.f32 %v104, %v272
    %v274 = vand.u32 %v273, 4294901760
    %v275 = vsub.f32 %v273, %v274
    %v276 = vand.u32 %v275, 4294901760
    %277 = vmatpush1.msra.mxu0 %v276
    %278 = vmatprep.subr.mxu0 0.0
    %v279 = vand.u32 %v105, 4294901760
    %v280 = vsub.f32 %v105, %v279
    %v281 = vand.u32 %v280, 4294901760
    %v282 = vsub.f32 %v280, %v281
    %v283 = vand.u32 %v282, 4294901760
    %284 = vmatpush1.msra.mxu0 %v283
    %285 = vmatprep.subr.mxu0 0.0
    %v286 = vand.u32 %v106, 4294901760
    %v287 = vsub.f32 %v106, %v286
    %v288 = vand.u32 %v287, 4294901760
    %v289 = vsub.f32 %v287, %v288
    %v290 = vand.u32 %v289, 4294901760
    %291 = vmatpush1.msra.mxu0 %v290
    %292 = vmatprep.subr.mxu0 0.0
    %v293 = vand.u32 %v107, 4294901760
    %v294 = vsub.f32 %v107, %v293
    %v295 = vand.u32 %v294, 4294901760
    %v296 = vsub.f32 %v294, %v295
    %v297 = vand.u32 %v296, 4294901760
    %298 = vmatpush1.msra.mxu0 %v297
    %299 = vmatprep.subr.mxu0 0.0
    %v300 = vand.u32 %v108, 4294901760
    %v301 = vsub.f32 %v108, %v300
    %v302 = vand.u32 %v301, 4294901760
    %v303 = vsub.f32 %v301, %v302
    %v304 = vand.u32 %v303, 4294901760
    %305 = vmatpush1.msra.mxu0 %v304
    %306 = vmatprep.subr.mxu0 0.0
    %v307 = vand.u32 %v109, 4294901760
    %v308 = vsub.f32 %v109, %v307
    %v309 = vand.u32 %v308, 4294901760
    %v310 = vsub.f32 %v308, %v309
    %v311 = vand.u32 %v310, 4294901760
    %312 = vmatpush1.msra.mxu0 %v311
    %313 = vmatprep.subr.mxu0 0.0
    %314 = vmatpush1.msra.mxu0 0.0
    %315 = vmatprep.subr.mxu0 0.0
    %316 = vmatpush1.msra.mxu0 0.0
    %317 = vmatprep.subr.mxu0 0.0
    %318 = vmatpush1.msra.mxu0 0.0
    %319 = vmatprep.subr.mxu0 0.0
    %320 = vmatpush1.msra.mxu0 0.0
    %321 = vmatprep.subr.mxu0 0.0
    %322 = vmatpush1.msra.mxu0 0.0
    %323 = vmatprep.subr.mxu0 0.0
    %324 = vmatpush1.msra.mxu0 0.0
    %325 = vmatprep.subr.mxu0 0.0
    %326 = vmatpush1.msra.mxu0 0.0
    %327 = vmatprep.subr.mxu0 0.0
    %328 = vmatpush1.msra.mxu0 0.0
    %329 = vmatprep.subr.mxu0 0.0
    %330 = vmatpush1.msra.mxu0 0.0
    %331 = vmatprep.subr.mxu0 0.0
    %332 = vmatpush1.msra.mxu0 0.0
    %333 = vmatprep.subr.mxu0 0.0
    %334 = vmatpush1.msra.mxu0 0.0
    %335 = vmatprep.subr.mxu0 0.0
    %336 = vmatpush1.msra.mxu0 0.0
    %337 = vmatprep.subr.mxu0 0.0
    %338 = vmatpush1.msra.mxu0 0.0
    %339 = vmatprep.subr.mxu0 0.0
    %340 = vmatpush1.msra.mxu0 0.0
    %341 = vmatprep.subr.mxu0 0.0
    %342 = vmatpush1.msra.mxu0 0.0
    %343 = vmatprep.subr.mxu0 0.0
    %344 = vmatpush1.msra.mxu0 0.0
    %345 = vmatprep.mubr.f32.mxu0 0.0
    %v346 = vand.u32 %v93, 4294901760
    %347 = vmatmul.mubr.f32.gmra.mrb[0].mxu0 %v346
    %v348 = vpop.f32.mrb[0].mxu0
    %v349 = vadd.f32 %v198, %v348
    %v350 = vpop.f32.mrb[0].mxu0
    %351 = vdwg.mxu0
    %352 = vmatprep.subr.mxu0 0.0
    %v353 = vand.u32 %v94, 4294901760
    %v354 = vsub.f32 %v94, %v353
    %355 = vmatpush1.msra.mxu0 %v354
    %356 = vmatprep.subr.mxu0 0.0
    %v357 = vand.u32 %v95, 4294901760
    %v358 = vsub.f32 %v95, %v357
    %359 = vmatpush1.msra.mxu0 %v358
    %360 = vmatprep.subr.mxu0 0.0
    %v361 = vand.u32 %v96, 4294901760
    %v362 = vsub.f32 %v96, %v361
    %363 = vmatpush1.msra.mxu0 %v362
    %364 = vmatprep.subr.mxu0 0.0
    %v365 = vand.u32 %v97, 4294901760
    %v366 = vsub.f32 %v97, %v365
    %367 = vmatpush1.msra.mxu0 %v366
    %368 = vmatprep.subr.mxu0 0.0
    %v369 = vand.u32 %v98, 4294901760
    %v370 = vsub.f32 %v98, %v369
    %371 = vmatpush1.msra.mxu0 %v370
    %372 = vmatprep.subr.mxu0 0.0
    %v373 = vand.u32 %v99, 4294901760
    %v374 = vsub.f32 %v99, %v373
    %375 = vmatpush1.msra.mxu0 %v374
    %376 = vmatprep.subr.mxu0 0.0
    %v377 = vand.u32 %v100, 4294901760
    %v378 = vsub.f32 %v100, %v377
    %379 = vmatpush1.msra.mxu0 %v378
    %380 = vmatprep.subr.mxu0 0.0
    %v381 = vand.u32 %v101, 4294901760
    %v382 = vsub.f32 %v101, %v381
    %383 = vmatpush1.msra.mxu0 %v382
    %384 = vmatprep.subr.mxu0 0.0
    %v385 = vand.u32 %v102, 4294901760
    %v386 = vsub.f32 %v102, %v385
    %387 = vmatpush1.msra.mxu0 %v386
    %388 = vmatprep.subr.mxu0 0.0
    %v389 = vand.u32 %v103, 4294901760
    %v390 = vsub.f32 %v103, %v389
    %391 = vmatpush1.msra.mxu0 %v390
    %392 = vmatprep.subr.mxu0 0.0
    %v393 = vand.u32 %v104, 4294901760
    %v394 = vsub.f32 %v104, %v393
    %395 = vmatpush1.msra.mxu0 %v394
    %396 = vmatprep.subr.mxu0 0.0
    %v397 = vand.u32 %v105, 4294901760
    %v398 = vsub.f32 %v105, %v397
    %399 = vmatpush1.msra.mxu0 %v398
    %400 = vmatprep.subr.mxu0 0.0
    %v401 = vand.u32 %v106, 4294901760
    %v402 = vsub.f32 %v106, %v401
    %403 = vmatpush1.msra.mxu0 %v402
    %404 = vmatprep.subr.mxu0 0.0
    %v405 = vand.u32 %v107, 4294901760
    %v406 = vsub.f32 %v107, %v405
    %407 = vmatpush1.msra.mxu0 %v406
    %408 = vmatprep.subr.mxu0 0.0
    %v409 = vand.u32 %v108, 4294901760
    %v410 = vsub.f32 %v108, %v409
    %411 = vmatpush1.msra.mxu0 %v410
    %412 = vmatprep.subr.mxu0 0.0
    %v413 = vand.u32 %v109, 4294901760
    %v414 = vsub.f32 %v109, %v413
    %415 = vmatpush1.msra.mxu0 %v414
    %416 = vmatprep.subr.mxu0 0.0
    %417 = vmatpush1.msra.mxu0 0.0
    %418 = vmatprep.subr.mxu0 0.0
    %419 = vmatpush1.msra.mxu0 0.0
    %420 = vmatprep.subr.mxu0 0.0
    %421 = vmatpush1.msra.mxu0 0.0
    %422 = vmatprep.subr.mxu0 0.0
    %423 = vmatpush1.msra.mxu0 0.0
    %424 = vmatprep.subr.mxu0 0.0
    %425 = vmatpush1.msra.mxu0 0.0
    %426 = vmatprep.subr.mxu0 0.0
    %427 = vmatpush1.msra.mxu0 0.0
    %428 = vmatprep.subr.mxu0 0.0
    %429 = vmatpush1.msra.mxu0 0.0
    %430 = vmatprep.subr.mxu0 0.0
    %431 = vmatpush1.msra.mxu0 0.0
    %432 = vmatprep.subr.mxu0 0.0
    %433 = vmatpush1.msra.mxu0 0.0
    %434 = vmatprep.subr.mxu0 0.0
    %435 = vmatpush1.msra.mxu0 0.0
    %436 = vmatprep.subr.mxu0 0.0
    %437 = vmatpush1.msra.mxu0 0.0
    %438 = vmatprep.subr.mxu0 0.0
    %439 = vmatpush1.msra.mxu0 0.0
    %440 = vmatprep.subr.mxu0 0.0
    %441 = vmatpush1.msra.mxu0 0.0
    %442 = vmatprep.subr.mxu0 0.0
    %443 = vmatpush1.msra.mxu0 0.0
    %444 = vmatprep.subr.mxu0 0.0
    %445 = vmatpush1.msra.mxu0 0.0
    %446 = vmatprep.subr.mxu0 0.0
    %447 = vmatpush1.msra.mxu0 0.0
    %448 = vmatprep.mubr.f32.mxu0 0.0
    %v449 = vand.u32 %v93, 4294901760
    %v450 = vsub.f32 %v93, %v449
    %451 = vmatmul.mubr.f32.gmra.mrb[0].mxu0 %v450
    %v452 = vpop.f32.mrb[0].mxu0
    %v453 = vadd.f32 %v349, %v452
    %v454 = vpop.f32.mrb[0].mxu0
    %455 = vdwg.mxu0
    %456 = vmatprep.subr.mxu0 0.0
    %v457 = vand.u32 %v94, 4294901760
    %458 = vmatpush1.msra.mxu0 %v457
    %459 = vmatprep.subr.mxu0 0.0
    %v460 = vand.u32 %v95, 4294901760
    %461 = vmatpush1.msra.mxu0 %v460
    %462 = vmatprep.subr.mxu0 0.0
    %v463 = vand.u32 %v96, 4294901760
    %464 = vmatpush1.msra.mxu0 %v463
    %465 = vmatprep.subr.mxu0 0.0
    %v466 = vand.u32 %v97, 4294901760
    %467 = vmatpush1.msra.mxu0 %v466
    %468 = vmatprep.subr.mxu0 0.0
    %v469 = vand.u32 %v98, 4294901760
    %470 = vmatpush1.msra.mxu0 %v469
    %471 = vmatprep.subr.mxu0 0.0
    %v472 = vand.u32 %v99, 4294901760
    %473 = vmatpush1.msra.mxu0 %v472
    %474 = vmatprep.subr.mxu0 0.0
    %v475 = vand.u32 %v100, 4294901760
    %476 = vmatpush1.msra.mxu0 %v475
    %477 = vmatprep.subr.mxu0 0.0
    %v478 = vand.u32 %v101, 4294901760
    %479 = vmatpush1.msra.mxu0 %v478
    %480 = vmatprep.subr.mxu0 0.0
    %v481 = vand.u32 %v102, 4294901760
    %482 = vmatpush1.msra.mxu0 %v481
    %483 = vmatprep.subr.mxu0 0.0
    %v484 = vand.u32 %v103, 4294901760
    %485 = vmatpush1.msra.mxu0 %v484
    %486 = vmatprep.subr.mxu0 0.0
    %v487 = vand.u32 %v104, 4294901760
    %488 = vmatpush1.msra.mxu0 %v487
    %489 = vmatprep.subr.mxu0 0.0
    %v490 = vand.u32 %v105, 4294901760
    %491 = vmatpush1.msra.mxu0 %v490
    %492 = vmatprep.subr.mxu0 0.0
    %v493 = vand.u32 %v106, 4294901760
    %494 = vmatpush1.msra.mxu0 %v493
    %495 = vmatprep.subr.mxu0 0.0
    %v496 = vand.u32 %v107, 4294901760
    %497 = vmatpush1.msra.mxu0 %v496
    %498 = vmatprep.subr.mxu0 0.0
    %v499 = vand.u32 %v108, 4294901760
    %500 = vmatpush1.msra.mxu0 %v499
    %501 = vmatprep.subr.mxu0 0.0
    %v502 = vand.u32 %v109, 4294901760
    %503 = vmatpush1.msra.mxu0 %v502
    %504 = vmatprep.subr.mxu0 0.0
    %505 = vmatpush1.msra.mxu0 0.0
    %506 = vmatprep.subr.mxu0 0.0
    %507 = vmatpush1.msra.mxu0 0.0
    %508 = vmatprep.subr.mxu0 0.0
    %509 = vmatpush1.msra.mxu0 0.0
    %510 = vmatprep.subr.mxu0 0.0
    %511 = vmatpush1.msra.mxu0 0.0
    %512 = vmatprep.subr.mxu0 0.0
    %513 = vmatpush1.msra.mxu0 0.0
    %514 = vmatprep.subr.mxu0 0.0
    %515 = vmatpush1.msra.mxu0 0.0
    %516 = vmatprep.subr.mxu0 0.0
    %517 = vmatpush1.msra.mxu0 0.0
    %518 = vmatprep.subr.mxu0 0.0
    %519 = vmatpush1.msra.mxu0 0.0
    %520 = vmatprep.subr.mxu0 0.0
    %521 = vmatpush1.msra.mxu0 0.0
    %522 = vmatprep.subr.mxu0 0.0
    %523 = vmatpush1.msra.mxu0 0.0
    %524 = vmatprep.subr.mxu0 0.0
    %525 = vmatpush1.msra.mxu0 0.0
    %526 = vmatprep.subr.mxu0 0.0
    %527 = vmatpush1.msra.mxu0 0.0
    %528 = vmatprep.subr.mxu0 0.0
    %529 = vmatpush1.msra.mxu0 0.0
    %530 = vmatprep.subr.mxu0 0.0
    %531 = vmatpush1.msra.mxu0 0.0
    %532 = vmatprep.subr.mxu0 0.0
    %533 = vmatpush1.msra.mxu0 0.0
    %534 = vmatprep.subr.mxu0 0.0
    %535 = vmatpush1.msra.mxu0 0.0
    %536 = vmatprep.mubr.f32.mxu0 0.0
    %v537 = vand.u32 %v93, 4294901760
    %v538 = vsub.f32 %v93, %v537
    %v539 = vand.u32 %v538, 4294901760
    %540 = vmatmul.mubr.f32.gmra.mrb[0].mxu0 %v539
    %v541 = vpop.f32.mrb[0].mxu0
    %v542 = vadd.f32 %v453, %v541
    %v543 = vpop.f32.mrb[0].mxu0
    %544 = vdwg.mxu0
    %545 = vmatprep.subr.mxu0 0.0
    %v546 = vand.u32 %v94, 4294901760
    %v547 = vsub.f32 %v94, %v546
    %v548 = vand.u32 %v547, 4294901760
    %549 = vmatpush1.msra.mxu0 %v548
    %550 = vmatprep.subr.mxu0 0.0
    %v551 = vand.u32 %v95, 4294901760
    %v552 = vsub.f32 %v95, %v551
    %v553 = vand.u32 %v552, 4294901760
    %554 = vmatpush1.msra.mxu0 %v553
    %555 = vmatprep.subr.mxu0 0.0
    %v556 = vand.u32 %v96, 4294901760
    %v557 = vsub.f32 %v96, %v556
    %v558 = vand.u32 %v557, 4294901760
    %559 = vmatpush1.msra.mxu0 %v558
    %560 = vmatprep.subr.mxu0 0.0
    %v561 = vand.u32 %v97, 4294901760
    %v562 = vsub.f32 %v97, %v561
    %v563 = vand.u32 %v562, 4294901760
    %564 = vmatpush1.msra.mxu0 %v563
    %565 = vmatprep.subr.mxu0 0.0
    %v566 = vand.u32 %v98, 4294901760
    %v567 = vsub.f32 %v98, %v566
    %v568 = vand.u32 %v567, 4294901760
    %569 = vmatpush1.msra.mxu0 %v568
    %570 = vmatprep.subr.mxu0 0.0
    %v571 = vand.u32 %v99, 4294901760
    %v572 = vsub.f32 %v99, %v571
    %v573 = vand.u32 %v572, 4294901760
    %574 = vmatpush1.msra.mxu0 %v573
    %575 = vmatprep.subr.mxu0 0.0
    %v576 = vand.u32 %v100, 4294901760
    %v577 = vsub.f32 %v100, %v576
    %v578 = vand.u32 %v577, 4294901760
    %579 = vmatpush1.msra.mxu0 %v578
    %580 = vmatprep.subr.mxu0 0.0
    %v581 = vand.u32 %v101, 4294901760
    %v582 = vsub.f32 %v101, %v581
    %v583 = vand.u32 %v582, 4294901760
    %584 = vmatpush1.msra.mxu0 %v583
    %585 = vmatprep.subr.mxu0 0.0
    %v586 = vand.u32 %v102, 4294901760
    %v587 = vsub.f32 %v102, %v586
    %v588 = vand.u32 %v587, 4294901760
    %589 = vmatpush1.msra.mxu0 %v588
    %590 = vmatprep.subr.mxu0 0.0
    %v591 = vand.u32 %v103, 4294901760
    %v592 = vsub.f32 %v103, %v591
    %v593 = vand.u32 %v592, 4294901760
    %594 = vmatpush1.msra.mxu0 %v593
    %595 = vmatprep.subr.mxu0 0.0
    %v596 = vand.u32 %v104, 4294901760
    %v597 = vsub.f32 %v104, %v596
    %v598 = vand.u32 %v597, 4294901760
    %599 = vmatpush1.msra.mxu0 %v598
    %600 = vmatprep.subr.mxu0 0.0
    %v601 = vand.u32 %v105, 4294901760
    %v602 = vsub.f32 %v105, %v601
    %v603 = vand.u32 %v602, 4294901760
    %604 = vmatpush1.msra.mxu0 %v603
    %605 = vmatprep.subr.mxu0 0.0
    %v606 = vand.u32 %v106, 4294901760
    %v607 = vsub.f32 %v106, %v606
    %v608 = vand.u32 %v607, 4294901760
    %609 = vmatpush1.msra.mxu0 %v608
    %610 = vmatprep.subr.mxu0 0.0
    %v611 = vand.u32 %v107, 4294901760
    %v612 = vsub.f32 %v107, %v611
    %v613 = vand.u32 %v612, 4294901760
    %614 = vmatpush1.msra.mxu0 %v613
    %615 = vmatprep.subr.mxu0 0.0
    %v616 = vand.u32 %v108, 4294901760
    %v617 = vsub.f32 %v108, %v616
    %v618 = vand.u32 %v617, 4294901760
    %619 = vmatpush1.msra.mxu0 %v618
    %620 = vmatprep.subr.mxu0 0.0
    %v621 = vand.u32 %v109, 4294901760
    %v622 = vsub.f32 %v109, %v621
    %v623 = vand.u32 %v622, 4294901760
    %624 = vmatpush1.msra.mxu0 %v623
    %625 = vmatprep.subr.mxu0 0.0
    %626 = vmatpush1.msra.mxu0 0.0
    %627 = vmatprep.subr.mxu0 0.0
    %628 = vmatpush1.msra.mxu0 0.0
    %629 = vmatprep.subr.mxu0 0.0
    %630 = vmatpush1.msra.mxu0 0.0
    %631 = vmatprep.subr.mxu0 0.0
    %632 = vmatpush1.msra.mxu0 0.0
    %633 = vmatprep.subr.mxu0 0.0
    %634 = vmatpush1.msra.mxu0 0.0
    %635 = vmatprep.subr.mxu0 0.0
    %636 = vmatpush1.msra.mxu0 0.0
    %637 = vmatprep.subr.mxu0 0.0
    %638 = vmatpush1.msra.mxu0 0.0
    %639 = vmatprep.subr.mxu0 0.0
    %640 = vmatpush1.msra.mxu0 0.0
    %641 = vmatprep.subr.mxu0 0.0
    %642 = vmatpush1.msra.mxu0 0.0
    %643 = vmatprep.subr.mxu0 0.0
    %644 = vmatpush1.msra.mxu0 0.0
    %645 = vmatprep.subr.mxu0 0.0
    %646 = vmatpush1.msra.mxu0 0.0
    %647 = vmatprep.subr.mxu0 0.0
    %648 = vmatpush1.msra.mxu0 0.0
    %649 = vmatprep.subr.mxu0 0.0
    %650 = vmatpush1.msra.mxu0 0.0
    %651 = vmatprep.subr.mxu0 0.0
    %652 = vmatpush1.msra.mxu0 0.0
    %653 = vmatprep.subr.mxu0 0.0
    %654 = vmatpush1.msra.mxu0 0.0
    %655 = vmatprep.subr.mxu0 0.0
    %656 = vmatpush1.msra.mxu0 0.0
    %657 = vmatprep.mubr.f32.mxu0 0.0
    %v658 = vand.u32 %v93, 4294901760
    %659 = vmatmul.mubr.f32.gmra.mrb[0].mxu0 %v658
    %v660 = vpop.f32.mrb[0].mxu0
    %v661 = vadd.f32 %v542, %v660
    %v662 = vpop.f32.mrb[0].mxu0
    %663 = vdwg.mxu0
    %664 = vmatprep.subr.mxu0 0.0
    %v665 = vand.u32 %v94, 4294901760
    %666 = vmatpush1.msra.mxu0 %v665
    %667 = vmatprep.subr.mxu0 0.0
    %v668 = vand.u32 %v95, 4294901760
    %669 = vmatpush1.msra.mxu0 %v668
    %670 = vmatprep.subr.mxu0 0.0
    %v671 = vand.u32 %v96, 4294901760
    %672 = vmatpush1.msra.mxu0 %v671
    %673 = vmatprep.subr.mxu0 0.0
    %v674 = vand.u32 %v97, 4294901760
    %675 = vmatpush1.msra.mxu0 %v674
    %676 = vmatprep.subr.mxu0 0.0
    %v677 = vand.u32 %v98, 4294901760
    %678 = vmatpush1.msra.mxu0 %v677
    %679 = vmatprep.subr.mxu0 0.0
    %v680 = vand.u32 %v99, 4294901760
    %681 = vmatpush1.msra.mxu0 %v680
    %682 = vmatprep.subr.mxu0 0.0
    %v683 = vand.u32 %v100, 4294901760
    %684 = vmatpush1.msra.mxu0 %v683
    %685 = vmatprep.subr.mxu0 0.0
    %v686 = vand.u32 %v101, 4294901760
    %687 = vmatpush1.msra.mxu0 %v686
    %688 = vmatprep.subr.mxu0 0.0
    %v689 = vand.u32 %v102, 4294901760
    %690 = vmatpush1.msra.mxu0 %v689
    %691 = vmatprep.subr.mxu0 0.0
    %v692 = vand.u32 %v103, 4294901760
    %693 = vmatpush1.msra.mxu0 %v692
    %694 = vmatprep.subr.mxu0 0.0
    %v695 = vand.u32 %v104, 4294901760
    %696 = vmatpush1.msra.mxu0 %v695
    %697 = vmatprep.subr.mxu0 0.0
    %v698 = vand.u32 %v105, 4294901760
    %699 = vmatpush1.msra.mxu0 %v698
    %700 = vmatprep.subr.mxu0 0.0
    %v701 = vand.u32 %v106, 4294901760
    %702 = vmatpush1.msra.mxu0 %v701
    %703 = vmatprep.subr.mxu0 0.0
    %v704 = vand.u32 %v107, 4294901760
    %705 = vmatpush1.msra.mxu0 %v704
    %706 = vmatprep.subr.mxu0 0.0
    %v707 = vand.u32 %v108, 4294901760
    %708 = vmatpush1.msra.mxu0 %v707
    %709 = vmatprep.subr.mxu0 0.0
    %v710 = vand.u32 %v109, 4294901760
    %711 = vmatpush1.msra.mxu0 %v710
    %712 = vmatprep.subr.mxu0 0.0
    %713 = vmatpush1.msra.mxu0 0.0
    %714 = vmatprep.subr.mxu0 0.0
    %715 = vmatpush1.msra.mxu0 0.0
    %716 = vmatprep.subr.mxu0 0.0
    %717 = vmatpush1.msra.mxu0 0.0
    %718 = vmatprep.subr.mxu0 0.0
    %719 = vmatpush1.msra.mxu0 0.0
    %720 = vmatprep.subr.mxu0 0.0
    %721 = vmatpush1.msra.mxu0 0.0
    %722 = vmatprep.subr.mxu0 0.0
    %723 = vmatpush1.msra.mxu0 0.0
    %724 = vmatprep.subr.mxu0 0.0
    %725 = vmatpush1.msra.mxu0 0.0
    %726 = vmatprep.subr.mxu0 0.0
    %727 = vmatpush1.msra.mxu0 0.0
    %728 = vmatprep.subr.mxu0 0.0
    %729 = vmatpush1.msra.mxu0 0.0
    %730 = vmatprep.subr.mxu0 0.0
    %731 = vmatpush1.msra.mxu0 0.0
    %732 = vmatprep.subr.mxu0 0.0
    %733 = vmatpush1.msra.mxu0 0.0
    %734 = vmatprep.subr.mxu0 0.0
    %735 = vmatpush1.msra.mxu0 0.0
    %736 = vmatprep.subr.mxu0 0.0
    %737 = vmatpush1.msra.mxu0 0.0
    %738 = vmatprep.subr.mxu0 0.0
    %739 = vmatpush1.msra.mxu0 0.0
    %740 = vmatprep.subr.mxu0 0.0
    %741 = vmatpush1.msra.mxu0 0.0
    %742 = vmatprep.subr.mxu0 0.0
    %743 = vmatpush1.msra.mxu0 0.0
    %744 = vmatprep.mubr.f32.mxu0 0.0
    %v745 = vand.u32 %v93, 4294901760
    %746 = vmatmul.mubr.f32.gmra.mrb[0].mxu0 %v745
    %v747 = vpop.f32.mrb[0].mxu0
    %v748 = vadd.f32 %v661, %v747
    %v749 = vpop.f32.mrb[0].mxu0
    %750 = vdwg.mxu0
    %v752 = vlaneseq
    %v753 = vshrl.u32 %v752, 7
    %v754 = vsub.s32 0, %v753
    %v755 = vrot.slane %v85, %v754
    %v757 = vmul.f32 %v755, %v748
    %758 = vmatprep.subr.mxu0 0.0
    %v759 = vand.u32 %v69, 4294901760
    %760 = vmatpush1.msra.mxu0 %v759
    %761 = vmatprep.subr.mxu0 0.0
    %v762 = vand.u32 %v70, 4294901760
    %763 = vmatpush1.msra.mxu0 %v762
    %764 = vmatprep.subr.mxu0 0.0
    %v765 = vand.u32 %v71, 4294901760
    %766 = vmatpush1.msra.mxu0 %v765
    %767 = vmatprep.subr.mxu0 0.0
    %v768 = vand.u32 %v72, 4294901760
    %769 = vmatpush1.msra.mxu0 %v768
    %770 = vmatprep.subr.mxu0 0.0
    %v771 = vand.u32 %v73, 4294901760
    %772 = vmatpush1.msra.mxu0 %v771
    %773 = vmatprep.subr.mxu0 0.0
    %v774 = vand.u32 %v74, 4294901760
    %775 = vmatpush1.msra.mxu0 %v774
    %776 = vmatprep.subr.mxu0 0.0
    %v777 = vand.u32 %v75, 4294901760
    %778 = vmatpush1.msra.mxu0 %v777
    %779 = vmatprep.subr.mxu0 0.0
    %v780 = vand.u32 %v76, 4294901760
    %781 = vmatpush1.msra.mxu0 %v780
    %782 = vmatprep.subr.mxu0 0.0
    %v783 = vand.u32 %v77, 4294901760
    %784 = vmatpush1.msra.mxu0 %v783
    %785 = vmatprep.subr.mxu0 0.0
    %v786 = vand.u32 %v78, 4294901760
    %787 = vmatpush1.msra.mxu0 %v786
    %788 = vmatprep.subr.mxu0 0.0
    %v789 = vand.u32 %v79, 4294901760
    %790 = vmatpush1.msra.mxu0 %v789
    %791 = vmatprep.subr.mxu0 0.0
    %v792 = vand.u32 %v80, 4294901760
    %793 = vmatpush1.msra.mxu0 %v792
    %794 = vmatprep.subr.mxu0 0.0
    %v795 = vand.u32 %v81, 4294901760
    %796 = vmatpush1.msra.mxu0 %v795
    %797 = vmatprep.subr.mxu0 0.0
    %v798 = vand.u32 %v82, 4294901760
    %799 = vmatpush1.msra.mxu0 %v798
    %800 = vmatprep.subr.mxu0 0.0
    %v801 = vand.u32 %v83, 4294901760
    %802 = vmatpush1.msra.mxu0 %v801
    %803 = vmatprep.subr.mxu0 0.0
    %v804 = vand.u32 %v84, 4294901760
    %805 = vmatpush1.msra.mxu0 %v804
    %806 = vmatprep.subr.mxu0 0.0
    %807 = vmatpush1.msra.mxu0 0.0
    %808 = vmatprep.subr.mxu0 0.0
    %809 = vmatpush1.msra.mxu0 0.0
    %810 = vmatprep.subr.mxu0 0.0
    %811 = vmatpush1.msra.mxu0 0.0
    %812 = vmatprep.subr.mxu0 0.0
    %813 = vmatpush1.msra.mxu0 0.0
    %814 = vmatprep.subr.mxu0 0.0
    %815 = vmatpush1.msra.mxu0 0.0
    %816 = vmatprep.subr.mxu0 0.0
    %817 = vmatpush1.msra.mxu0 0.0
    %818 = vmatprep.subr.mxu0 0.0
    %819 = vmatpush1.msra.mxu0 0.0
    %820 = vmatprep.subr.mxu0 0.0
    %821 = vmatpush1.msra.mxu0 0.0
    %822 = vmatprep.subr.mxu0 0.0
    %823 = vmatpush1.msra.mxu0 0.0
    %824 = vmatprep.subr.mxu0 0.0
    %825 = vmatpush1.msra.mxu0 0.0
    %826 = vmatprep.subr.mxu0 0.0
    %827 = vmatpush1.msra.mxu0 0.0
    %828 = vmatprep.subr.mxu0 0.0
    %829 = vmatpush1.msra.mxu0 0.0
    %830 = vmatprep.subr.mxu0 0.0
    %831 = vmatpush1.msra.mxu0 0.0
    %832 = vmatprep.subr.mxu0 0.0
    %833 = vmatpush1.msra.mxu0 0.0
    %834 = vmatprep.subr.mxu0 0.0
    %835 = vmatpush1.msra.mxu0 0.0
    %836 = vmatprep.subr.mxu0 0.0
    %837 = vmatpush1.msra.mxu0 0.0
    %838 = vmatprep.mubr.f32.mxu0 0.0
    %v839 = vand.u32 %v68, 4294901760
    %v840 = vsub.f32 %v68, %v839
    %v841 = vand.u32 %v840, 4294901760
    %v842 = vsub.f32 %v840, %v841
    %v843 = vand.u32 %v842, 4294901760
    %844 = vmatmul.mubr.f32.gmra.mrb[0].mxu0 %v843
    %v845 = vpop.f32.mrb[0].mxu0
    %v846 = vadd.f32 %v757, %v845
    %v847 = vpop.f32.mrb[0].mxu0
    %848 = vdwg.mxu0
    %849 = vmatprep.subr.mxu0 0.0
    %v850 = vand.u32 %v69, 4294901760
    %v851 = vsub.f32 %v69, %v850
    %v852 = vand.u32 %v851, 4294901760
    %v853 = vsub.f32 %v851, %v852
    %v854 = vand.u32 %v853, 4294901760
    %855 = vmatpush1.msra.mxu0 %v854
    %856 = vmatprep.subr.mxu0 0.0
    %v857 = vand.u32 %v70, 4294901760
    %v858 = vsub.f32 %v70, %v857
    %v859 = vand.u32 %v858, 4294901760
    %v860 = vsub.f32 %v858, %v859
    %v861 = vand.u32 %v860, 4294901760
    %862 = vmatpush1.msra.mxu0 %v861
    %863 = vmatprep.subr.mxu0 0.0
    %v864 = vand.u32 %v71, 4294901760
    %v865 = vsub.f32 %v71, %v864
    %v866 = vand.u32 %v865, 4294901760
    %v867 = vsub.f32 %v865, %v866
    %v868 = vand.u32 %v867, 4294901760
    %869 = vmatpush1.msra.mxu0 %v868
    %870 = vmatprep.subr.mxu0 0.0
    %v871 = vand.u32 %v72, 4294901760
    %v872 = vsub.f32 %v72, %v871
    %v873 = vand.u32 %v872, 4294901760
    %v874 = vsub.f32 %v872, %v873
    %v875 = vand.u32 %v874, 4294901760
    %876 = vmatpush1.msra.mxu0 %v875
    %877 = vmatprep.subr.mxu0 0.0
    %v878 = vand.u32 %v73, 4294901760
    %v879 = vsub.f32 %v73, %v878
    %v880 = vand.u32 %v879, 4294901760
    %v881 = vsub.f32 %v879, %v880
    %v882 = vand.u32 %v881, 4294901760
    %883 = vmatpush1.msra.mxu0 %v882
    %884 = vmatprep.subr.mxu0 0.0
    %v885 = vand.u32 %v74, 4294901760
    %v886 = vsub.f32 %v74, %v885
    %v887 = vand.u32 %v886, 4294901760
    %v888 = vsub.f32 %v886, %v887
    %v889 = vand.u32 %v888, 4294901760
    %890 = vmatpush1.msra.mxu0 %v889
    %891 = vmatprep.subr.mxu0 0.0
    %v892 = vand.u32 %v75, 4294901760
    %v893 = vsub.f32 %v75, %v892
    %v894 = vand.u32 %v893, 4294901760
    %v895 = vsub.f32 %v893, %v894
    %v896 = vand.u32 %v895, 4294901760
    %897 = vmatpush1.msra.mxu0 %v896
    %898 = vmatprep.subr.mxu0 0.0
    %v899 = vand.u32 %v76, 4294901760
    %v900 = vsub.f32 %v76, %v899
    %v901 = vand.u32 %v900, 4294901760
    %v902 = vsub.f32 %v900, %v901
    %v903 = vand.u32 %v902, 4294901760
    %904 = vmatpush1.msra.mxu0 %v903
    %905 = vmatprep.subr.mxu0 0.0
    %v906 = vand.u32 %v77, 4294901760
    %v907 = vsub.f32 %v77, %v906
    %v908 = vand.u32 %v907, 4294901760
    %v909 = vsub.f32 %v907, %v908
    %v910 = vand.u32 %v909, 4294901760
    %911 = vmatpush1.msra.mxu0 %v910
    %912 = vmatprep.subr.mxu0 0.0
    %v913 = vand.u32 %v78, 4294901760
    %v914 = vsub.f32 %v78, %v913
    %v915 = vand.u32 %v914, 4294901760
    %v916 = vsub.f32 %v914, %v915
    %v917 = vand.u32 %v916, 4294901760
    %918 = vmatpush1.msra.mxu0 %v917
    %919 = vmatprep.subr.mxu0 0.0
    %v920 = vand.u32 %v79, 4294901760
    %v921 = vsub.f32 %v79, %v920
    %v922 = vand.u32 %v921, 4294901760
    %v923 = vsub.f32 %v921, %v922
    %v924 = vand.u32 %v923, 4294901760
    %925 = vmatpush1.msra.mxu0 %v924
    %926 = vmatprep.subr.mxu0 0.0
    %v927 = vand.u32 %v80, 4294901760
    %v928 = vsub.f32 %v80, %v927
    %v929 = vand.u32 %v928, 4294901760
    %v930 = vsub.f32 %v928, %v929
    %v931 = vand.u32 %v930, 4294901760
    %932 = vmatpush1.msra.mxu0 %v931
    %933 = vmatprep.subr.mxu0 0.0
    %v934 = vand.u32 %v81, 4294901760
    %v935 = vsub.f32 %v81, %v934
    %v936 = vand.u32 %v935, 4294901760
    %v937 = vsub.f32 %v935, %v936
    %v938 = vand.u32 %v937, 4294901760
    %939 = vmatpush1.msra.mxu0 %v938
    %940 = vmatprep.subr.mxu0 0.0
    %v941 = vand.u32 %v82, 4294901760
    %v942 = vsub.f32 %v82, %v941
    %v943 = vand.u32 %v942, 4294901760
    %v944 = vsub.f32 %v942, %v943
    %v945 = vand.u32 %v944, 4294901760
    %946 = vmatpush1.msra.mxu0 %v945
    %947 = vmatprep.subr.mxu0 0.0
    %v948 = vand.u32 %v83, 4294901760
    %v949 = vsub.f32 %v83, %v948
    %v950 = vand.u32 %v949, 4294901760
    %v951 = vsub.f32 %v949, %v950
    %v952 = vand.u32 %v951, 4294901760
    %953 = vmatpush1.msra.mxu0 %v952
    %954 = vmatprep.subr.mxu0 0.0
    %v955 = vand.u32 %v84, 4294901760
    %v956 = vsub.f32 %v84, %v955
    %v957 = vand.u32 %v956, 4294901760
    %v958 = vsub.f32 %v956, %v957
    %v959 = vand.u32 %v958, 4294901760
    %960 = vmatpush1.msra.mxu0 %v959
    %961 = vmatprep.subr.mxu0 0.0
    %962 = vmatpush1.msra.mxu0 0.0
    %963 = vmatprep.subr.mxu0 0.0
    %964 = vmatpush1.msra.mxu0 0.0
    %965 = vmatprep.subr.mxu0 0.0
    %966 = vmatpush1.msra.mxu0 0.0
    %967 = vmatprep.subr.mxu0 0.0
    %968 = vmatpush1.msra.mxu0 0.0
    %969 = vmatprep.subr.mxu0 0.0
    %970 = vmatpush1.msra.mxu0 0.0
    %971 = vmatprep.subr.mxu0 0.0
    %972 = vmatpush1.msra.mxu0 0.0
    %973 = vmatprep.subr.mxu0 0.0
    %974 = vmatpush1.msra.mxu0 0.0
    %975 = vmatprep.subr.mxu0 0.0
    %976 = vmatpush1.msra.mxu0 0.0
    %977 = vmatprep.subr.mxu0 0.0
    %978 = vmatpush1.msra.mxu0 0.0
    %979 = vmatprep.subr.mxu0 0.0
    %980 = vmatpush1.msra.mxu0 0.0
    %981 = vmatprep.subr.mxu0 0.0
    %982 = vmatpush1.msra.mxu0 0.0
    %983 = vmatprep.subr.mxu0 0.0
    %984 = vmatpush1.msra.mxu0 0.0
    %985 = vmatprep.subr.mxu0 0.0
    %986 = vmatpush1.msra.mxu0 0.0
    %987 = vmatprep.subr.mxu0 0.0
    %988 = vmatpush1.msra.mxu0 0.0
    %989 = vmatprep.subr.mxu0 0.0
    %990 = vmatpush1.msra.mxu0 0.0
    %991 = vmatprep.subr.mxu0 0.0
    %992 = vmatpush1.msra.mxu0 0.0
    %993 = vmatprep.mubr.f32.mxu0 0.0
    %v994 = vand.u32 %v68, 4294901760
    %995 = vmatmul.mubr.f32.gmra.mrb[0].mxu0 %v994
    %v996 = vpop.f32.mrb[0].mxu0
    %v997 = vadd.f32 %v846, %v996
    %v998 = vpop.f32.mrb[0].mxu0
    %999 = vdwg.mxu0
    %1000 = vmatprep.subr.mxu0 0.0
    %v1001 = vand.u32 %v69, 4294901760
    %v1002 = vsub.f32 %v69, %v1001
    %1003 = vmatpush1.msra.mxu0 %v1002
    %1004 = vmatprep.subr.mxu0 0.0
    %v1005 = vand.u32 %v70, 4294901760
    %v1006 = vsub.f32 %v70, %v1005
    %1007 = vmatpush1.msra.mxu0 %v1006
    %1008 = vmatprep.subr.mxu0 0.0
    %v1009 = vand.u32 %v71, 4294901760
    %v1010 = vsub.f32 %v71, %v1009
    %1011 = vmatpush1.msra.mxu0 %v1010
    %1012 = vmatprep.subr.mxu0 0.0
    %v1013 = vand.u32 %v72, 4294901760
    %v1014 = vsub.f32 %v72, %v1013
    %1015 = vmatpush1.msra.mxu0 %v1014
    %1016 = vmatprep.subr.mxu0 0.0
    %v1017 = vand.u32 %v73, 4294901760
    %v1018 = vsub.f32 %v73, %v1017
    %1019 = vmatpush1.msra.mxu0 %v1018
    %1020 = vmatprep.subr.mxu0 0.0
    %v1021 = vand.u32 %v74, 4294901760
    %v1022 = vsub.f32 %v74, %v1021
    %1023 = vmatpush1.msra.mxu0 %v1022
    %1024 = vmatprep.subr.mxu0 0.0
    %v1025 = vand.u32 %v75, 4294901760
    %v1026 = vsub.f32 %v75, %v1025
    %1027 = vmatpush1.msra.mxu0 %v1026
    %1028 = vmatprep.subr.mxu0 0.0
    %v1029 = vand.u32 %v76, 4294901760
    %v1030 = vsub.f32 %v76, %v1029
    %1031 = vmatpush1.msra.mxu0 %v1030
    %1032 = vmatprep.subr.mxu0 0.0
    %v1033 = vand.u32 %v77, 4294901760
    %v1034 = vsub.f32 %v77, %v1033
    %1035 = vmatpush1.msra.mxu0 %v1034
    %1036 = vmatprep.subr.mxu0 0.0
    %v1037 = vand.u32 %v78, 4294901760
    %v1038 = vsub.f32 %v78, %v1037
    %1039 = vmatpush1.msra.mxu0 %v1038
    %1040 = vmatprep.subr.mxu0 0.0
    %v1041 = vand.u32 %v79, 4294901760
    %v1042 = vsub.f32 %v79, %v1041
    %1043 = vmatpush1.msra.mxu0 %v1042
    %1044 = vmatprep.subr.mxu0 0.0
    %v1045 = vand.u32 %v80, 4294901760
    %v1046 = vsub.f32 %v80, %v1045
    %1047 = vmatpush1.msra.mxu0 %v1046
    %1048 = vmatprep.subr.mxu0 0.0
    %v1049 = vand.u32 %v81, 4294901760
    %v1050 = vsub.f32 %v81, %v1049
    %1051 = vmatpush1.msra.mxu0 %v1050
    %1052 = vmatprep.subr.mxu0 0.0
    %v1053 = vand.u32 %v82, 4294901760
    %v1054 = vsub.f32 %v82, %v1053
    %1055 = vmatpush1.msra.mxu0 %v1054
    %1056 = vmatprep.subr.mxu0 0.0
    %v1057 = vand.u32 %v83, 4294901760
    %v1058 = vsub.f32 %v83, %v1057
    %1059 = vmatpush1.msra.mxu0 %v1058
    %1060 = vmatprep.subr.mxu0 0.0
    %v1061 = vand.u32 %v84, 4294901760
    %v1062 = vsub.f32 %v84, %v1061
    %1063 = vmatpush1.msra.mxu0 %v1062
    %1064 = vmatprep.subr.mxu0 0.0
    %1065 = vmatpush1.msra.mxu0 0.0
    %1066 = vmatprep.subr.mxu0 0.0
    %1067 = vmatpush1.msra.mxu0 0.0
    %1068 = vmatprep.subr.mxu0 0.0
    %1069 = vmatpush1.msra.mxu0 0.0
    %1070 = vmatprep.subr.mxu0 0.0
    %1071 = vmatpush1.msra.mxu0 0.0
    %1072 = vmatprep.subr.mxu0 0.0
    %1073 = vmatpush1.msra.mxu0 0.0
    %1074 = vmatprep.subr.mxu0 0.0
    %1075 = vmatpush1.msra.mxu0 0.0
    %1076 = vmatprep.subr.mxu0 0.0
    %1077 = vmatpush1.msra.mxu0 0.0
    %1078 = vmatprep.subr.mxu0 0.0
    %1079 = vmatpush1.msra.mxu0 0.0
    %1080 = vmatprep.subr.mxu0 0.0
    %1081 = vmatpush1.msra.mxu0 0.0
    %1082 = vmatprep.subr.mxu0 0.0
    %1083 = vmatpush1.msra.mxu0 0.0
    %1084 = vmatprep.subr.mxu0 0.0
    %1085 = vmatpush1.msra.mxu0 0.0
    %1086 = vmatprep.subr.mxu0 0.0
    %1087 = vmatpush1.msra.mxu0 0.0
    %1088 = vmatprep.subr.mxu0 0.0
    %1089 = vmatpush1.msra.mxu0 0.0
    %1090 = vmatprep.subr.mxu0 0.0
    %1091 = vmatpush1.msra.mxu0 0.0
    %1092 = vmatprep.subr.mxu0 0.0
    %1093 = vmatpush1.msra.mxu0 0.0
    %1094 = vmatprep.subr.mxu0 0.0
    %1095 = vmatpush1.msra.mxu0 0.0
    %1096 = vmatprep.mubr.f32.mxu0 0.0
    %v1097 = vand.u32 %v68, 4294901760
    %v1098 = vsub.f32 %v68, %v1097
    %1099 = vmatmul.mubr.f32.gmra.mrb[0].mxu0 %v1098
    %v1100 = vpop.f32.mrb[0].mxu0
    %v1101 = vadd.f32 %v997, %v1100
    %v1102 = vpop.f32.mrb[0].mxu0
    %1103 = vdwg.mxu0
    %1104 = vmatprep.subr.mxu0 0.0
    %v1105 = vand.u32 %v69, 4294901760
    %1106 = vmatpush1.msra.mxu0 %v1105
    %1107 = vmatprep.subr.mxu0 0.0
    %v1108 = vand.u32 %v70, 4294901760
    %1109 = vmatpush1.msra.mxu0 %v1108
    %1110 = vmatprep.subr.mxu0 0.0
    %v1111 = vand.u32 %v71, 4294901760
    %1112 = vmatpush1.msra.mxu0 %v1111
    %1113 = vmatprep.subr.mxu0 0.0
    %v1114 = vand.u32 %v72, 4294901760
    %1115 = vmatpush1.msra.mxu0 %v1114
    %1116 = vmatprep.subr.mxu0 0.0
    %v1117 = vand.u32 %v73, 4294901760
    %1118 = vmatpush1.msra.mxu0 %v1117
    %1119 = vmatprep.subr.mxu0 0.0
    %v1120 = vand.u32 %v74, 4294901760
    %1121 = vmatpush1.msra.mxu0 %v1120
    %1122 = vmatprep.subr.mxu0 0.0
    %v1123 = vand.u32 %v75, 4294901760
    %1124 = vmatpush1.msra.mxu0 %v1123
    %1125 = vmatprep.subr.mxu0 0.0
    %v1126 = vand.u32 %v76, 4294901760
    %1127 = vmatpush1.msra.mxu0 %v1126
    %1128 = vmatprep.subr.mxu0 0.0
    %v1129 = vand.u32 %v77, 4294901760
    %1130 = vmatpush1.msra.mxu0 %v1129
    %1131 = vmatprep.subr.mxu0 0.0
    %v1132 = vand.u32 %v78, 4294901760
    %1133 = vmatpush1.msra.mxu0 %v1132
    %1134 = vmatprep.subr.mxu0 0.0
    %v1135 = vand.u32 %v79, 4294901760
    %1136 = vmatpush1.msra.mxu0 %v1135
    %1137 = vmatprep.subr.mxu0 0.0
    %v1138 = vand.u32 %v80, 4294901760
    %1139 = vmatpush1.msra.mxu0 %v1138
    %1140 = vmatprep.subr.mxu0 0.0
    %v1141 = vand.u32 %v81, 4294901760
    %1142 = vmatpush1.msra.mxu0 %v1141
    %1143 = vmatprep.subr.mxu0 0.0
    %v1144 = vand.u32 %v82, 4294901760
    %1145 = vmatpush1.msra.mxu0 %v1144
    %1146 = vmatprep.subr.mxu0 0.0
    %v1147 = vand.u32 %v83, 4294901760
    %1148 = vmatpush1.msra.mxu0 %v1147
    %1149 = vmatprep.subr.mxu0 0.0
    %v1150 = vand.u32 %v84, 4294901760
    %1151 = vmatpush1.msra.mxu0 %v1150
    %1152 = vmatprep.subr.mxu0 0.0
    %1153 = vmatpush1.msra.mxu0 0.0
    %1154 = vmatprep.subr.mxu0 0.0
    %1155 = vmatpush1.msra.mxu0 0.0
    %1156 = vmatprep.subr.mxu0 0.0
    %1157 = vmatpush1.msra.mxu0 0.0
    %1158 = vmatprep.subr.mxu0 0.0
    %1159 = vmatpush1.msra.mxu0 0.0
    %1160 = vmatprep.subr.mxu0 0.0
    %1161 = vmatpush1.msra.mxu0 0.0
    %1162 = vmatprep.subr.mxu0 0.0
    %1163 = vmatpush1.msra.mxu0 0.0
    %1164 = vmatprep.subr.mxu0 0.0
    %1165 = vmatpush1.msra.mxu0 0.0
    %1166 = vmatprep.subr.mxu0 0.0
    %1167 = vmatpush1.msra.mxu0 0.0
    %1168 = vmatprep.subr.mxu0 0.0
    %1169 = vmatpush1.msra.mxu0 0.0
    %1170 = vmatprep.subr.mxu0 0.0
    %1171 = vmatpush1.msra.mxu0 0.0
    %1172 = vmatprep.subr.mxu0 0.0
    %1173 = vmatpush1.msra.mxu0 0.0
    %1174 = vmatprep.subr.mxu0 0.0
    %1175 = vmatpush1.msra.mxu0 0.0
    %1176 = vmatprep.subr.mxu0 0.0
    %1177 = vmatpush1.msra.mxu0 0.0
    %1178 = vmatprep.subr.mxu0 0.0
    %1179 = vmatpush1.msra.mxu0 0.0
    %1180 = vmatprep.subr.mxu0 0.0
    %1181 = vmatpush1.msra.mxu0 0.0
    %1182 = vmatprep.subr.mxu0 0.0
    %1183 = vmatpush1.msra.mxu0 0.0
    %1184 = vmatprep.mubr.f32.mxu0 0.0
    %v1185 = vand.u32 %v68, 4294901760
    %v1186 = vsub.f32 %v68, %v1185
    %v1187 = vand.u32 %v1186, 4294901760
    %1188 = vmatmul.mubr.f32.gmra.mrb[0].mxu0 %v1187
    %v1189 = vpop.f32.mrb[0].mxu0
    %v1190 = vadd.f32 %v1101, %v1189
    %v1191 = vpop.f32.mrb[0].mxu0
    %1192 = vdwg.mxu0
    %1193 = vmatprep.subr.mxu0 0.0
    %v1194 = vand.u32 %v69, 4294901760
    %v1195 = vsub.f32 %v69, %v1194
    %v1196 = vand.u32 %v1195, 4294901760
    %1197 = vmatpush1.msra.mxu0 %v1196
    %1198 = vmatprep.subr.mxu0 0.0
    %v1199 = vand.u32 %v70, 4294901760
    %v1200 = vsub.f32 %v70, %v1199
    %v1201 = vand.u32 %v1200, 4294901760
    %1202 = vmatpush1.msra.mxu0 %v1201
    %1203 = vmatprep.subr.mxu0 0.0
    %v1204 = vand.u32 %v71, 4294901760
    %v1205 = vsub.f32 %v71, %v1204
    %v1206 = vand.u32 %v1205, 4294901760
    %1207 = vmatpush1.msra.mxu0 %v1206
    %1208 = vmatprep.subr.mxu0 0.0
    %v1209 = vand.u32 %v72, 4294901760
    %v1210 = vsub.f32 %v72, %v1209
    %v1211 = vand.u32 %v1210, 4294901760
    %1212 = vmatpush1.msra.mxu0 %v1211
    %1213 = vmatprep.subr.mxu0 0.0
    %v1214 = vand.u32 %v73, 4294901760
    %v1215 = vsub.f32 %v73, %v1214
    %v1216 = vand.u32 %v1215, 4294901760
    %1217 = vmatpush1.msra.mxu0 %v1216
    %1218 = vmatprep.subr.mxu0 0.0
    %v1219 = vand.u32 %v74, 4294901760
    %v1220 = vsub.f32 %v74, %v1219
    %v1221 = vand.u32 %v1220, 4294901760
    %1222 = vmatpush1.msra.mxu0 %v1221
    %1223 = vmatprep.subr.mxu0 0.0
    %v1224 = vand.u32 %v75, 4294901760
    %v1225 = vsub.f32 %v75, %v1224
    %v1226 = vand.u32 %v1225, 4294901760
    %1227 = vmatpush1.msra.mxu0 %v1226
    %1228 = vmatprep.subr.mxu0 0.0
    %v1229 = vand.u32 %v76, 4294901760
    %v1230 = vsub.f32 %v76, %v1229
    %v1231 = vand.u32 %v1230, 4294901760
    %1232 = vmatpush1.msra.mxu0 %v1231
    %1233 = vmatprep.subr.mxu0 0.0
    %v1234 = vand.u32 %v77, 4294901760
    %v1235 = vsub.f32 %v77, %v1234
    %v1236 = vand.u32 %v1235, 4294901760
    %1237 = vmatpush1.msra.mxu0 %v1236
    %1238 = vmatprep.subr.mxu0 0.0
    %v1239 = vand.u32 %v78, 4294901760
    %v1240 = vsub.f32 %v78, %v1239
    %v1241 = vand.u32 %v1240, 4294901760
    %1242 = vmatpush1.msra.mxu0 %v1241
    %1243 = vmatprep.subr.mxu0 0.0
    %v1244 = vand.u32 %v79, 4294901760
    %v1245 = vsub.f32 %v79, %v1244
    %v1246 = vand.u32 %v1245, 4294901760
    %1247 = vmatpush1.msra.mxu0 %v1246
    %1248 = vmatprep.subr.mxu0 0.0
    %v1249 = vand.u32 %v80, 4294901760
    %v1250 = vsub.f32 %v80, %v1249
    %v1251 = vand.u32 %v1250, 4294901760
    %1252 = vmatpush1.msra.mxu0 %v1251
    %1253 = vmatprep.subr.mxu0 0.0
    %v1254 = vand.u32 %v81, 4294901760
    %v1255 = vsub.f32 %v81, %v1254
    %v1256 = vand.u32 %v1255, 4294901760
    %1257 = vmatpush1.msra.mxu0 %v1256
    %1258 = vmatprep.subr.mxu0 0.0
    %v1259 = vand.u32 %v82, 4294901760
    %v1260 = vsub.f32 %v82, %v1259
    %v1261 = vand.u32 %v1260, 4294901760
    %1262 = vmatpush1.msra.mxu0 %v1261
    %1263 = vmatprep.subr.mxu0 0.0
    %v1264 = vand.u32 %v83, 4294901760
    %v1265 = vsub.f32 %v83, %v1264
    %v1266 = vand.u32 %v1265, 4294901760
    %1267 = vmatpush1.msra.mxu0 %v1266
    %1268 = vmatprep.subr.mxu0 0.0
    %v1269 = vand.u32 %v84, 4294901760
    %v1270 = vsub.f32 %v84, %v1269
    %v1271 = vand.u32 %v1270, 4294901760
    %1272 = vmatpush1.msra.mxu0 %v1271
    %1273 = vmatprep.subr.mxu0 0.0
    %1274 = vmatpush1.msra.mxu0 0.0
    %1275 = vmatprep.subr.mxu0 0.0
    %1276 = vmatpush1.msra.mxu0 0.0
    %1277 = vmatprep.subr.mxu0 0.0
    %1278 = vmatpush1.msra.mxu0 0.0
    %1279 = vmatprep.subr.mxu0 0.0
    %1280 = vmatpush1.msra.mxu0 0.0
    %1281 = vmatprep.subr.mxu0 0.0
    %1282 = vmatpush1.msra.mxu0 0.0
    %1283 = vmatprep.subr.mxu0 0.0
    %1284 = vmatpush1.msra.mxu0 0.0
    %1285 = vmatprep.subr.mxu0 0.0
    %1286 = vmatpush1.msra.mxu0 0.0
    %1287 = vmatprep.subr.mxu0 0.0
    %1288 = vmatpush1.msra.mxu0 0.0
    %1289 = vmatprep.subr.mxu0 0.0
    %1290 = vmatpush1.msra.mxu0 0.0
    %1291 = vmatprep.subr.mxu0 0.0
    %1292 = vmatpush1.msra.mxu0 0.0
    %1293 = vmatprep.subr.mxu0 0.0
    %1294 = vmatpush1.msra.mxu0 0.0
    %1295 = vmatprep.subr.mxu0 0.0
    %1296 = vmatpush1.msra.mxu0 0.0
    %1297 = vmatprep.subr.mxu0 0.0
    %1298 = vmatpush1.msra.mxu0 0.0
    %1299 = vmatprep.subr.mxu0 0.0
    %1300 = vmatpush1.msra.mxu0 0.0
    %1301 = vmatprep.subr.mxu0 0.0
    %1302 = vmatpush1.msra.mxu0 0.0
    %1303 = vmatprep.subr.mxu0 0.0
    %1304 = vmatpush1.msra.mxu0 0.0
    %1305 = vmatprep.mubr.f32.mxu0 0.0
    %v1306 = vand.u32 %v68, 4294901760
    %1307 = vmatmul.mubr.f32.gmra.mrb[0].mxu0 %v1306
    %v1308 = vpop.f32.mrb[0].mxu0
    %v1309 = vadd.f32 %v1190, %v1308
    %v1310 = vpop.f32.mrb[0].mxu0
    %1311 = vdwg.mxu0
    %1312 = vmatprep.subr.mxu0 0.0
    %v1313 = vand.u32 %v69, 4294901760
    %1314 = vmatpush1.msra.mxu0 %v1313
    %1315 = vmatprep.subr.mxu0 0.0
    %v1316 = vand.u32 %v70, 4294901760
    %1317 = vmatpush1.msra.mxu0 %v1316
    %1318 = vmatprep.subr.mxu0 0.0
    %v1319 = vand.u32 %v71, 4294901760
    %1320 = vmatpush1.msra.mxu0 %v1319
    %1321 = vmatprep.subr.mxu0 0.0
    %v1322 = vand.u32 %v72, 4294901760
    %1323 = vmatpush1.msra.mxu0 %v1322
    %1324 = vmatprep.subr.mxu0 0.0
    %v1325 = vand.u32 %v73, 4294901760
    %1326 = vmatpush1.msra.mxu0 %v1325
    %1327 = vmatprep.subr.mxu0 0.0
    %v1328 = vand.u32 %v74, 4294901760
    %1329 = vmatpush1.msra.mxu0 %v1328
    %1330 = vmatprep.subr.mxu0 0.0
    %v1331 = vand.u32 %v75, 4294901760
    %1332 = vmatpush1.msra.mxu0 %v1331
    %1333 = vmatprep.subr.mxu0 0.0
    %v1334 = vand.u32 %v76, 4294901760
    %1335 = vmatpush1.msra.mxu0 %v1334
    %1336 = vmatprep.subr.mxu0 0.0
    %v1337 = vand.u32 %v77, 4294901760
    %1338 = vmatpush1.msra.mxu0 %v1337
    %1339 = vmatprep.subr.mxu0 0.0
    %v1340 = vand.u32 %v78, 4294901760
    %1341 = vmatpush1.msra.mxu0 %v1340
    %1342 = vmatprep.subr.mxu0 0.0
    %v1343 = vand.u32 %v79, 4294901760
    %1344 = vmatpush1.msra.mxu0 %v1343
    %1345 = vmatprep.subr.mxu0 0.0
    %v1346 = vand.u32 %v80, 4294901760
    %1347 = vmatpush1.msra.mxu0 %v1346
    %1348 = vmatprep.subr.mxu0 0.0
    %v1349 = vand.u32 %v81, 4294901760
    %1350 = vmatpush1.msra.mxu0 %v1349
    %1351 = vmatprep.subr.mxu0 0.0
    %v1352 = vand.u32 %v82, 4294901760
    %1353 = vmatpush1.msra.mxu0 %v1352
    %1354 = vmatprep.subr.mxu0 0.0
    %v1355 = vand.u32 %v83, 4294901760
    %1356 = vmatpush1.msra.mxu0 %v1355
    %1357 = vmatprep.subr.mxu0 0.0
    %v1358 = vand.u32 %v84, 4294901760
    %1359 = vmatpush1.msra.mxu0 %v1358
    %1360 = vmatprep.subr.mxu0 0.0
    %1361 = vmatpush1.msra.mxu0 0.0
    %1362 = vmatprep.subr.mxu0 0.0
    %1363 = vmatpush1.msra.mxu0 0.0
    %1364 = vmatprep.subr.mxu0 0.0
    %1365 = vmatpush1.msra.mxu0 0.0
    %1366 = vmatprep.subr.mxu0 0.0
    %1367 = vmatpush1.msra.mxu0 0.0
    %1368 = vmatprep.subr.mxu0 0.0
    %1369 = vmatpush1.msra.mxu0 0.0
    %1370 = vmatprep.subr.mxu0 0.0
    %1371 = vmatpush1.msra.mxu0 0.0
    %1372 = vmatprep.subr.mxu0 0.0
    %1373 = vmatpush1.msra.mxu0 0.0
    %1374 = vmatprep.subr.mxu0 0.0
    %1375 = vmatpush1.msra.mxu0 0.0
    %1376 = vmatprep.subr.mxu0 0.0
    %1377 = vmatpush1.msra.mxu0 0.0
    %1378 = vmatprep.subr.mxu0 0.0
    %1379 = vmatpush1.msra.mxu0 0.0
    %1380 = vmatprep.subr.mxu0 0.0
    %1381 = vmatpush1.msra.mxu0 0.0
    %1382 = vmatprep.subr.mxu0 0.0
    %1383 = vmatpush1.msra.mxu0 0.0
    %1384 = vmatprep.subr.mxu0 0.0
    %1385 = vmatpush1.msra.mxu0 0.0
    %1386 = vmatprep.subr.mxu0 0.0
    %1387 = vmatpush1.msra.mxu0 0.0
    %1388 = vmatprep.subr.mxu0 0.0
    %1389 = vmatpush1.msra.mxu0 0.0
    %1390 = vmatprep.subr.mxu0 0.0
    %1391 = vmatpush1.msra.mxu0 0.0
    %1392 = vmatprep.mubr.f32.mxu0 0.0
    %v1393 = vand.u32 %v68, 4294901760
    %1394 = vmatmul.mubr.f32.gmra.mrb[0].mxu0 %v1393
    %v1395 = vpop.f32.mrb[0].mxu0
    %v1396 = vadd.f32 %v1309, %v1395
    %v1397 = vpop.f32.mrb[0].mxu0
    %1398 = vdwg.mxu0
    %v1399 = vld [vmem:[#allocation8] sm:$0xff]
    %v1400 = vadd.f32 %v1399, %v1396
    %1401 = vst [vmem:[#allocation8] sm:$0xff] %v1400
    // Predicated region
    $region42: #{tpu_custom_call.1} parent=1 // pred_check
      %p1402 = pneg %p63
    $region43: #{tpu_custom_call.1} parent=1 // pred_check_branch
      %1404 = sbr.rel (%p1402) target = $region45
    $region44: #{tpu_custom_call.1} parent=1 // pred_region
      %v1405 = vld [vmem:[#allocation8] sm:$0xff]
      %v1406 = vld [vmem:[%s5] sm:$0x1]
      %v1408 = vlaneseq
      %v1409 = vshrl.u32 %v1408, 7
      %v1410 = vsub.s32 0, %v1409
      %v1411 = vrot.slane %v1406, %v1410
      %v1413 = vadd.f32 %v1405, %v1411
      %1414 = vst [vmem:[#allocation8] sm:$0xff] %v1413
    $region45: #{tpu_custom_call.1} parent=1 // pred_fallthru
      _
    // Predicated region
    $region46: #{tpu_custom_call.1} parent=1 // pred_check
      _
    $region47: #{tpu_custom_call.1} parent=1 // pred_check_branch
      %1416 = sbr.rel (0) target = $region49
    $region48: #{tpu_custom_call.1} parent=1 // pred_region
      %s1418 = ssub.s32 128, 128
      %1419 = vsyncadd [#allocation4], %s1418
      %s1421 = sshll.u32 [#allocation8], 4
      %s1422 = int_to_ptr.vmem [resolvable:$true] %s1421
      %1424 = dma.vmem_to_hbm [thread:$0]  %s1422, 128, %s6, [#allocation4]
    $region49: #{tpu_custom_call.1} parent=1 // pred_fallthru
      _
    // Predicated region
    $region50: #{tpu_custom_call.1} parent=1 // pred_check
      _
    $region51: #{tpu_custom_call.1} parent=1 // pred_check_branch
      %1426 = sbr.rel (0) target = $region53
    $region52: #{tpu_custom_call.1} parent=1 // pred_region
      %1427 = dma.done [#allocation4], 128
    $region53: #{tpu_custom_call.1} parent=1 // pred_fallthru
      _
    %1428 = vsyncpa [#allocation3], 1
    %1429 = vsyncpa [#allocation6], 1
    %1430 = vsyncpa [#allocation4], 1

</llo_original>
